<compile_context>
chip_gen: v5e
topology: v5e:2x2
jax: 0.10.0
libtpu: 0.0.40
codegen_flags: <defaults>
</compile_context>

<pallas_src>
import functools

import jax
import jax.numpy as jnp
import numpy as np
from jax.experimental import pallas as pl
from jax.experimental.pallas import tpu as pltpu

TB_MAX = 64   # cap on images per grid step (sublane interleave factor)
C = 8         # channels after conv1 / conv2


def _choose_tb(n):
    """Batch tile: multiple of 8, <= TB_MAX, and (when possible) grid >= 2."""
    if n <= 8:
        return 8
    half = -(-n // 2)              # ceil(n/2) -> keep at least 2 grid steps
    tb = -(-half // 8) * 8         # round up to a multiple of 8
    return min(TB_MAX, tb)


# ----------------------------------------------------------------------------
# The fused kernel (built per TB; TB is a trace-time Python constant).
#
# Activation layout (2-D, MXU/VPU friendly):
#   rows  (sublane dim) = spatial_row * TB + image_in_tile
#   lanes (lane dim)    = spatial_col * C  + channel
# Pools keep the layout "uncompacted": valid entries sit at strided rows/lanes
# and the in-between garbage is either never read or multiplied by zero rows
# of the next (pre-packed) weight matrix.
# ----------------------------------------------------------------------------
def _make_kernel(tb):
    def kernel(x_ref, m1_ref, b1_ref, m2_ref, b2_ref,
               wf1_ref, bf1_ref, wf2_ref, bf2_ref, o_ref):
        f32 = jnp.float32
        bf16 = jnp.bfloat16
        x = x_ref[...]                                        # [28*tb, 28] f32

        # conv1 (1->8, 3x3, VALID): single fused K=84 banded matmul.
        # Lane-concat the three row-shifted slices (f32 slices, offsets are
        # multiples of tb>=8), cast once to bf16, one MXU push.
        x1 = jnp.concatenate(
            [x[0 * tb:26 * tb, :], x[1 * tb:27 * tb, :], x[2 * tb:28 * tb, :]],
            axis=1).astype(bf16)                              # [26*tb, 84]
        a1 = jnp.dot(x1, m1_ref[...], preferred_element_type=f32)
        a1 = jnp.maximum(a1 + b1_ref[...], 0.0)               # [26*tb, 26*C]

        # max_pool2d(2): shifted maxes (f32); valid at rows 2*tb*i+b, lanes 2*C*j+c
        r1 = jnp.maximum(a1[0:25 * tb, :], a1[tb:26 * tb, :])
        q1 = jnp.maximum(r1[:, 0:25 * C], r1[:, C:26 * C])    # [25*tb, 25*C]
        q1b = q1.astype(bf16)

        # conv2 (8->8, 3x3, VALID) over the uncompacted layout: 3 banded
        # matmuls, K=200 each, bf16 operands / f32 accumulation.  bf16 row
        # offsets 2*tb, 4*tb are multiples of 16 for any tb multiple of 8.
        acc2 = jnp.dot(q1b[0 * tb:21 * tb, :], m2_ref[0], preferred_element_type=f32)
        acc2 = acc2 + jnp.dot(q1b[2 * tb:23 * tb, :], m2_ref[1], preferred_element_type=f32)
        acc2 = acc2 + jnp.dot(q1b[4 * tb:25 * tb, :], m2_ref[2], preferred_element_type=f32)
        a2 = jnp.maximum(acc2 + b2_ref[...], 0.0)             # [21*tb, 11*C]

        # max_pool2d(2) (11 -> 5, floor): valid at rows 4*tb*h+b, lanes 2*C*w+c
        r2 = jnp.maximum(a2[0:19 * tb, :], a2[2 * tb:21 * tb, :])
        p2 = jnp.maximum(r2[:, 0:10 * C], r2[:, C:11 * C])    # [19*tb, 10*C] f32

        # fc1 + ReLU: single K=400 matmul.  The five pooled row-blocks are
        # lane-concatenated; the lane gather and torch.flatten (c,h,w) order
        # are folded into wf1 (garbage lanes hit zero weight rows).
        p2c = jnp.concatenate(
            [p2[4 * tb * h:4 * tb * h + tb, :] for h in range(5)],
            axis=1).astype(bf16)                              # [tb, 400]
        hid = jnp.dot(p2c, wf1_ref[...], preferred_element_type=f32)
        hid = jnp.maximum(hid + bf1_ref[...], 0.0)            # [tb, 64] f32

        # fc2 (padded 10 -> 128 lanes, pad bias -1e30) + log_softmax (f32)
        logits = jnp.dot(hid.astype(bf16), wf2_ref[...],
                         preferred_element_type=f32) + bf2_ref[...]
        m = jnp.max(logits, axis=-1, keepdims=True)
        z = logits - m
        lse = jnp.log(jnp.sum(jnp.exp(z), axis=-1, keepdims=True))
        o_ref[...] = z - lse                                  # [tb, 128]
    return kernel


# ----------------------------------------------------------------------------
# One-time weight repacking (plain numpy; runs once, outside the jitted forward)
# ----------------------------------------------------------------------------
def prepare_params(params):
    w1, b1, w2, b2, fw1, fb1, fw2, fb2 = [np.asarray(p, np.float32) for p in params]

    # conv1 banded matrices, stacked over kernel rows -> [84, 26*C]:
    #   m1s[28*dy + xo + dx, xo*C + co] = w1[co, 0, dy, dx]
    m1 = np.zeros((3, 28, 26 * C), np.float32)
    for dy in range(3):
        for dx in range(3):
            for xo in range(26):
                m1[dy, xo + dx, xo * C:(xo + 1) * C] = w1[:, 0, dy, dx]
    m1s = m1.reshape(3 * 28, 26 * C)
    b1row = np.tile(b1, 26).reshape(1, 26 * C)

    # conv2 banded matrices over the uncompacted pooled layout:
    #   m2[dy][2*C*(jo+dx) + ci, C*jo + co] = w2[co, ci, dy, dx]
    m2 = np.zeros((3, 25 * C, 11 * C), np.float32)
    for dy in range(3):
        for dx in range(3):
            for jo in range(11):
                m2[dy, 2 * C * (jo + dx):2 * C * (jo + dx) + C,
                   C * jo:C * (jo + 1)] = w2[:, :, dy, dx].T          # [ci, co]
    b2row = np.tile(b2, 11).reshape(1, 11 * C)

    # fc1: uncompacted-pool lane gather + torch.flatten (c,h,w) ordering folded
    # in, stacked over the 5 pooled rows -> [400, 64]:
    #   wf1s[80*h + 2*C*w + c, k] = fc1.weight[k, c*25 + h*5 + w]
    wf1s = np.zeros((5, 10 * C, 64), np.float32)
    for hh in range(5):
        for ww in range(5):
            for c in range(C):
                wf1s[hh, 2 * C * ww + c, :] = fw1[:, c * 25 + hh * 5 + ww]
    wf1s = wf1s.reshape(5 * 10 * C, 64)
    bf1row = fb1.reshape(1, 64)

    # fc2: pad 10 -> 128 output lanes (pad bias very negative -> softmax ignores)
    wf2p = np.zeros((64, 128), np.float32)
    wf2p[:, :10] = fw2.T
    bf2p = np.full((1, 128), -1e30, np.float32)
    bf2p[:, :10] = fb2

    bf16 = jnp.bfloat16
    return (jnp.asarray(m1s, bf16), jnp.asarray(b1row),
            jnp.asarray(m2, bf16), jnp.asarray(b2row),
            jnp.asarray(wf1s, bf16), jnp.asarray(bf1row),
            jnp.asarray(wf2p, bf16), jnp.asarray(bf2p))


# ----------------------------------------------------------------------------
# Fused forward pass (single pallas_call, grid over batch tiles)
# ----------------------------------------------------------------------------
@jax.jit
def convnet_forward(x_nchw, prepped):
    m1s, b1row, m2, b2row, wf1s, bf1row, wf2p, bf2p = prepped
    n = x_nchw.shape[0]
    tb = _choose_tb(n)
    g = -(-n // tb)
    n_pad = g * tb

    x = x_nchw.astype(jnp.float32)[:, 0]                    # [N, 28, 28]
    if n_pad != n:
        x = jnp.pad(x, ((0, n_pad - n), (0, 0), (0, 0)))
    # Interleave the batch into the sublane dim: row = step*28*tb + y*tb + b
    x = x.reshape(g, tb, 28, 28).transpose(0, 2, 1, 3).reshape(g * 28 * tb, 28)

    # Advisory cost estimate so XLA overlaps the surrounding glue ops.
    flops_step = (2 * 26 * tb * 84 * 208 + 3 * 2 * 21 * tb * 200 * 88
                  + 2 * tb * 400 * 64 + 2 * tb * 64 * 128)
    bytes_acc = (n_pad * 28 * 28 * 4 + n_pad * 128 * 4
                 + sum(int(np.prod(a.shape)) * a.dtype.itemsize for a in prepped))
    cost = pl.CostEstimate(flops=int(g * flops_step),
                           transcendentals=int(n_pad * 129),
                           bytes_accessed=int(bytes_acc))

    out = pl.pallas_call(
        _make_kernel(tb),
        out_shape=jax.ShapeDtypeStruct((n_pad, 128), jnp.float32),
        grid=(g,),
        in_specs=[
            pl.BlockSpec((28 * tb, 28), lambda i: (i, 0)),            # input tile (f32)
            pl.BlockSpec((84, 26 * C), lambda i: (0, 0)),             # conv1 fused W (bf16)
            pl.BlockSpec((1, 26 * C), lambda i: (0, 0)),              # conv1 bias row
            pl.BlockSpec((3, 25 * C, 11 * C), lambda i: (0, 0, 0)),   # conv2 banded W (bf16)
            pl.BlockSpec((1, 11 * C), lambda i: (0, 0)),              # conv2 bias row
            pl.BlockSpec((5 * 10 * C, 64), lambda i: (0, 0)),         # fc1 fused W (bf16)
            pl.BlockSpec((1, 64), lambda i: (0, 0)),                  # fc1 bias
            pl.BlockSpec((64, 128), lambda i: (0, 0)),                # fc2 padded W (bf16)
            pl.BlockSpec((1, 128), lambda i: (0, 0)),                 # fc2 bias (padded)
        ],
        out_specs=pl.BlockSpec((tb, 128), lambda i: (i, 0)),
        compiler_params=pltpu.CompilerParams(
            dimension_semantics=("parallel",),
            vmem_limit_bytes=32 * 1024 * 1024),
        cost_estimate=cost,
    )(x, m1s, b1row, m2, b2row, wf1s, bf1row, wf2p, bf2p)

    # Only columns [:10] are real class scores; lanes 10..127 hold ~-1e30 pad.
    return out[:n, :10]


# ----------------------------------------------------------------------------
# Pure-JAX reference (correctness sanity check, f32 everywhere)
# ----------------------------------------------------------------------------
def reference_forward(x_nchw, params):
    w1, b1, w2, b2, fw1, fb1, fw2, fb2 = params
    x = jnp.transpose(x_nchw, (0, 2, 3, 1)).astype(jnp.float32)

    def conv(x, w, b):
        y = jax.lax.conv_general_dilated(
            x, jnp.transpose(w, (2, 3, 1, 0)), (1, 1), "VALID",
            dimension_numbers=("NHWC", "HWIO", "NHWC"))
        return y + b

    def pool(x):
        return jax.lax.reduce_window(
            x, -jnp.inf, jax.lax.max, (1, 2, 2, 1), (1, 2, 2, 1), "VALID")

    x = pool(jax.nn.relu(conv(x, w1, b1)))
    x = pool(jax.nn.relu(conv(x, w2, b2)))
    x = jnp.transpose(x, (0, 3, 1, 2)).reshape(x.shape[0], -1)
    x = jax.nn.relu(x @ fw1.T + fb1)
    x = x @ fw2.T + fb2
    return jax.nn.log_softmax(x, axis=-1)


# ----------------------------------------------------------------------------
# Deterministic parameter init (PyTorch layouts)
# ----------------------------------------------------------------------------
def init_params(key):
    ks = jax.random.split(key, 8)
    s = 0.1
    w1 = jax.random.normal(ks[0], (8, 1, 3, 3), jnp.float32) * s    # conv1.weight
    b1 = jax.random.normal(ks[1], (8,), jnp.float32) * s            # conv1.bias
    w2 = jax.random.normal(ks[2], (8, 8, 3, 3), jnp.float32) * s    # conv2.weight
    b2 = jax.random.normal(ks[3], (8,), jnp.float32) * s            # conv2.bias
    fw1 = jax.random.normal(ks[4], (64, 200), jnp.float32) * s      # fc1.weight
    fb1 = jax.random.normal(ks[5], (64,), jnp.float32) * s          # fc1.bias
    fw2 = jax.random.normal(ks[6], (10, 64), jnp.float32) * s       # fc2.weight
    fb2 = jax.random.normal(ks[7], (10,), jnp.float32) * s          # fc2.bias
    return (w1, b1, w2, b2, fw1, fb1, fw2, fb2)


if __name__ == "__main__":
    key = jax.random.PRNGKey(0)
    k_x, k_p = jax.random.split(key)
    # fc1 input of 200 = 8 * 5 * 5 implies a 28x28 single-channel input (MNIST).
    params = init_params(k_p)
    prepped = prepare_params(params)

    # batch=2: latency path (TB=8, g=1).  batch=32: TB=16, g=2 exercises the
    # pipelined multi-tile path (and 2-TC sharding on v7x).
    for n in (2, 32):
        x = jax.random.normal(jax.random.fold_in(k_x, n), (n, 1, 28, 28), jnp.float32)
        out = jax.block_until_ready(convnet_forward(x, prepped))
        assert out.shape == (n, 10) and out.dtype == jnp.float32
        ref = jax.block_until_ready(reference_forward(x, params))
        assert bool(jnp.all(jnp.isfinite(out)))
        # bf16 MXU operands with f32 accumulation -> loosened tolerance.
        assert bool(jnp.allclose(out, ref, rtol=2e-2, atol=3e-2)), (
            f"mismatch vs reference (n={n}, "
            f"max|diff|={float(jnp.max(jnp.abs(out - ref)))})")

    print("KERNEL_OK")
</pallas_src>

<mosaic_0001>
module attributes {stable_mosaic.version = 11 : i64} {
  func.func @kernel(%arg0: i32, %arg1: memref<224x28xf32, #tpu.memory_space<vmem>>, %arg2: memref<84x208xbf16, #tpu.memory_space<vmem>>, %arg3: memref<1x208xf32, #tpu.memory_space<vmem>>, %arg4: memref<3x200x88xbf16, #tpu.memory_space<vmem>>, %arg5: memref<1x88xf32, #tpu.memory_space<vmem>>, %arg6: memref<400x64xbf16, #tpu.memory_space<vmem>>, %arg7: memref<1x64xf32, #tpu.memory_space<vmem>>, %arg8: memref<64x128xbf16, #tpu.memory_space<vmem>>, %arg9: memref<1x128xf32, #tpu.memory_space<vmem>>, %arg10: memref<8x128xf32, #tpu.memory_space<vmem>>) attributes {dimension_semantics = [#tpu.dimension_semantics<parallel>], iteration_bounds = array<i64: 1>, scalar_prefetch = 0 : i64, scratch_operands = 0 : i64, tpu.core_type = #tpu.core_type<tc>, window_params = [{transform_indices = @transform_0, window_bounds = array<i64: 224, 28>}, {pipeline_mode = #tpu.pipeline_mode<synchronous>, transform_indices = @transform_1, window_bounds = array<i64: 84, 208>}, {pipeline_mode = #tpu.pipeline_mode<synchronous>, transform_indices = @transform_2, window_bounds = array<i64: 1, 208>}, {pipeline_mode = #tpu.pipeline_mode<synchronous>, transform_indices = @transform_3, window_bounds = array<i64: 3, 200, 88>}, {pipeline_mode = #tpu.pipeline_mode<synchronous>, transform_indices = @transform_4, window_bounds = array<i64: 1, 88>}, {pipeline_mode = #tpu.pipeline_mode<synchronous>, transform_indices = @transform_5, window_bounds = array<i64: 400, 64>}, {pipeline_mode = #tpu.pipeline_mode<synchronous>, transform_indices = @transform_6, window_bounds = array<i64: 1, 64>}, {pipeline_mode = #tpu.pipeline_mode<synchronous>, transform_indices = @transform_7, window_bounds = array<i64: 64, 128>}, {pipeline_mode = #tpu.pipeline_mode<synchronous>, transform_indices = @transform_8, window_bounds = array<i64: 1, 128>}, {transform_indices = @transform_9, window_bounds = array<i64: 8, 128>}]} {
    %c0 = arith.constant 0 : index
    %c0_0 = arith.constant 0 : index
    %0 = vector.load %arg1[%c0, %c0_0] : memref<224x28xf32, #tpu.memory_space<vmem>>, vector<224x28xf32>
    %1 = vector.extract_strided_slice %0 {offsets = [0, 0], sizes = [208, 28], strides = [1, 1]} : vector<224x28xf32> to vector<208x28xf32>
    %2 = vector.extract_strided_slice %0 {offsets = [8, 0], sizes = [208, 28], strides = [1, 1]} : vector<224x28xf32> to vector<208x28xf32>
    %3 = vector.extract_strided_slice %0 {offsets = [16, 0], sizes = [208, 28], strides = [1, 1]} : vector<224x28xf32> to vector<208x28xf32>
    %4 = tpu.concatenate %1, %2, %3 in 1 : vector<208x28xf32>, vector<208x28xf32>, vector<208x28xf32> -> vector<208x84xf32>
    %5 = arith.truncf %4 : vector<208x84xf32> to vector<208x84xbf16>
    %c0_1 = arith.constant 0 : index
    %c0_2 = arith.constant 0 : index
    %6 = vector.load %arg2[%c0_1, %c0_2] : memref<84x208xbf16, #tpu.memory_space<vmem>>, vector<84x208xbf16>
    %cst = arith.constant dense<0.000000e+00> : vector<208x208xf32>
    %7 = tpu.matmul %5, %6, %cst {dimension_numbers = #tpu.dot_dimension_numbers<[1], [0], [0], [1], [0, 0, 1, 1], [], []>} : vector<208x84xbf16>, vector<84x208xbf16>, vector<208x208xf32> -> vector<208x208xf32>
    %c0_3 = arith.constant 0 : index
    %c0_4 = arith.constant 0 : index
    %8 = vector.load %arg3[%c0_3, %c0_4] : memref<1x208xf32, #tpu.memory_space<vmem>>, vector<1x208xf32>
    %9 = vector.broadcast %8 : vector<1x208xf32> to vector<208x208xf32>
    %10 = arith.addf %7, %9 : vector<208x208xf32>
    %cst_5 = arith.constant 0.000000e+00 : f32
    %11 = vector.broadcast %cst_5 : f32 to vector<208x208xf32>
    %12 = arith.maximumf %10, %11 : vector<208x208xf32>
    %13 = vector.extract_strided_slice %12 {offsets = [0, 0], sizes = [200, 208], strides = [1, 1]} : vector<208x208xf32> to vector<200x208xf32>
    %14 = vector.extract_strided_slice %12 {offsets = [8, 0], sizes = [200, 208], strides = [1, 1]} : vector<208x208xf32> to vector<200x208xf32>
    %15 = arith.maximumf %13, %14 : vector<200x208xf32>
    %16 = vector.extract_strided_slice %15 {offsets = [0, 0], sizes = [200, 200], strides = [1, 1]} : vector<200x208xf32> to vector<200x200xf32>
    %17 = vector.extract_strided_slice %15 {offsets = [0, 8], sizes = [200, 200], strides = [1, 1]} : vector<200x208xf32> to vector<200x200xf32>
    %18 = arith.maximumf %16, %17 : vector<200x200xf32>
    %19 = arith.truncf %18 : vector<200x200xf32> to vector<200x200xbf16>
    %20 = vector.extract_strided_slice %19 {offsets = [0, 0], sizes = [168, 200], strides = [1, 1]} : vector<200x200xbf16> to vector<168x200xbf16>
    %c0_6 = arith.constant 0 : index
    %c0_7 = arith.constant 0 : index
    %c0_8 = arith.constant 0 : index
    %21 = vector.load %arg4[%c0_6, %c0_7, %c0_8] : memref<3x200x88xbf16, #tpu.memory_space<vmem>>, vector<1x200x88xbf16>
    %22 = vector.shape_cast %21 : vector<1x200x88xbf16> to vector<200x88xbf16>
    %cst_9 = arith.constant dense<0.000000e+00> : vector<168x88xf32>
    %23 = tpu.matmul %20, %22, %cst_9 {dimension_numbers = #tpu.dot_dimension_numbers<[1], [0], [0], [1], [0, 0, 1, 1], [], []>} : vector<168x200xbf16>, vector<200x88xbf16>, vector<168x88xf32> -> vector<168x88xf32>
    %24 = vector.extract_strided_slice %19 {offsets = [16, 0], sizes = [168, 200], strides = [1, 1]} : vector<200x200xbf16> to vector<168x200xbf16>
    %c1 = arith.constant 1 : index
    %c0_10 = arith.constant 0 : index
    %c0_11 = arith.constant 0 : index
    %25 = vector.load %arg4[%c1, %c0_10, %c0_11] : memref<3x200x88xbf16, #tpu.memory_space<vmem>>, vector<1x200x88xbf16>
    %26 = vector.shape_cast %25 : vector<1x200x88xbf16> to vector<200x88xbf16>
    %cst_12 = arith.constant dense<0.000000e+00> : vector<168x88xf32>
    %27 = tpu.matmul %24, %26, %cst_12 {dimension_numbers = #tpu.dot_dimension_numbers<[1], [0], [0], [1], [0, 0, 1, 1], [], []>} : vector<168x200xbf16>, vector<200x88xbf16>, vector<168x88xf32> -> vector<168x88xf32>
    %28 = arith.addf %23, %27 : vector<168x88xf32>
    %29 = vector.extract_strided_slice %19 {offsets = [32, 0], sizes = [168, 200], strides = [1, 1]} : vector<200x200xbf16> to vector<168x200xbf16>
    %c2 = arith.constant 2 : index
    %c0_13 = arith.constant 0 : index
    %c0_14 = arith.constant 0 : index
    %30 = vector.load %arg4[%c2, %c0_13, %c0_14] : memref<3x200x88xbf16, #tpu.memory_space<vmem>>, vector<1x200x88xbf16>
    %31 = vector.shape_cast %30 : vector<1x200x88xbf16> to vector<200x88xbf16>
    %cst_15 = arith.constant dense<0.000000e+00> : vector<168x88xf32>
    %32 = tpu.matmul %29, %31, %cst_15 {dimension_numbers = #tpu.dot_dimension_numbers<[1], [0], [0], [1], [0, 0, 1, 1], [], []>} : vector<168x200xbf16>, vector<200x88xbf16>, vector<168x88xf32> -> vector<168x88xf32>
    %33 = arith.addf %28, %32 : vector<168x88xf32>
    %c0_16 = arith.constant 0 : index
    %c0_17 = arith.constant 0 : index
    %34 = vector.load %arg5[%c0_16, %c0_17] : memref<1x88xf32, #tpu.memory_space<vmem>>, vector<1x88xf32>
    %35 = vector.broadcast %34 : vector<1x88xf32> to vector<168x88xf32>
    %36 = arith.addf %33, %35 : vector<168x88xf32>
    %cst_18 = arith.constant 0.000000e+00 : f32
    %37 = vector.broadcast %cst_18 : f32 to vector<168x88xf32>
    %38 = arith.maximumf %36, %37 : vector<168x88xf32>
    %39 = vector.extract_strided_slice %38 {offsets = [0, 0], sizes = [152, 88], strides = [1, 1]} : vector<168x88xf32> to vector<152x88xf32>
    %40 = vector.extract_strided_slice %38 {offsets = [16, 0], sizes = [152, 88], strides = [1, 1]} : vector<168x88xf32> to vector<152x88xf32>
    %41 = arith.maximumf %39, %40 : vector<152x88xf32>
    %42 = vector.extract_strided_slice %41 {offsets = [0, 0], sizes = [152, 80], strides = [1, 1]} : vector<152x88xf32> to vector<152x80xf32>
    %43 = vector.extract_strided_slice %41 {offsets = [0, 8], sizes = [152, 80], strides = [1, 1]} : vector<152x88xf32> to vector<152x80xf32>
    %44 = arith.maximumf %42, %43 : vector<152x80xf32>
    %45 = vector.extract_strided_slice %44 {offsets = [0, 0], sizes = [8, 80], strides = [1, 1]} : vector<152x80xf32> to vector<8x80xf32>
    %46 = vector.extract_strided_slice %44 {offsets = [32, 0], sizes = [8, 80], strides = [1, 1]} : vector<152x80xf32> to vector<8x80xf32>
    %47 = vector.extract_strided_slice %44 {offsets = [64, 0], sizes = [8, 80], strides = [1, 1]} : vector<152x80xf32> to vector<8x80xf32>
    %48 = vector.extract_strided_slice %44 {offsets = [96, 0], sizes = [8, 80], strides = [1, 1]} : vector<152x80xf32> to vector<8x80xf32>
    %49 = vector.extract_strided_slice %44 {offsets = [128, 0], sizes = [8, 80], strides = [1, 1]} : vector<152x80xf32> to vector<8x80xf32>
    %50 = tpu.concatenate %45, %46, %47, %48, %49 in 1 : vector<8x80xf32>, vector<8x80xf32>, vector<8x80xf32>, vector<8x80xf32>, vector<8x80xf32> -> vector<8x400xf32>
    %51 = arith.truncf %50 : vector<8x400xf32> to vector<8x400xbf16>
    %c0_19 = arith.constant 0 : index
    %c0_20 = arith.constant 0 : index
    %52 = vector.load %arg6[%c0_19, %c0_20] : memref<400x64xbf16, #tpu.memory_space<vmem>>, vector<400x64xbf16>
    %cst_21 = arith.constant dense<0.000000e+00> : vector<8x64xf32>
    %53 = tpu.matmul %51, %52, %cst_21 {dimension_numbers = #tpu.dot_dimension_numbers<[1], [0], [0], [1], [0, 0, 1, 1], [], []>} : vector<8x400xbf16>, vector<400x64xbf16>, vector<8x64xf32> -> vector<8x64xf32>
    %c0_22 = arith.constant 0 : index
    %c0_23 = arith.constant 0 : index
    %54 = vector.load %arg7[%c0_22, %c0_23] : memref<1x64xf32, #tpu.memory_space<vmem>>, vector<1x64xf32>
    %55 = vector.broadcast %54 : vector<1x64xf32> to vector<8x64xf32>
    %56 = arith.addf %53, %55 : vector<8x64xf32>
    %cst_24 = arith.constant 0.000000e+00 : f32
    %57 = vector.broadcast %cst_24 : f32 to vector<8x64xf32>
    %58 = arith.maximumf %56, %57 : vector<8x64xf32>
    %59 = arith.truncf %58 : vector<8x64xf32> to vector<8x64xbf16>
    %c0_25 = arith.constant 0 : index
    %c0_26 = arith.constant 0 : index
    %60 = vector.load %arg8[%c0_25, %c0_26] : memref<64x128xbf16, #tpu.memory_space<vmem>>, vector<64x128xbf16>
    %cst_27 = arith.constant dense<0.000000e+00> : vector<8x128xf32>
    %61 = tpu.matmul %59, %60, %cst_27 {dimension_numbers = #tpu.dot_dimension_numbers<[1], [0], [0], [1], [0, 0, 1, 1], [], []>} : vector<8x64xbf16>, vector<64x128xbf16>, vector<8x128xf32> -> vector<8x128xf32>
    %c0_28 = arith.constant 0 : index
    %c0_29 = arith.constant 0 : index
    %62 = vector.load %arg9[%c0_28, %c0_29] : memref<1x128xf32, #tpu.memory_space<vmem>>, vector<1x128xf32>
    %63 = vector.broadcast %62 : vector<1x128xf32> to vector<8x128xf32>
    %64 = arith.addf %61, %63 : vector<8x128xf32>
    %cst_30 = arith.constant dense<0xFF800000> : vector<8xf32>
    %65 = vector.multi_reduction <maximumf>, %64, %cst_30 [1] : vector<8x128xf32> to vector<8xf32>
    %66 = vector.shape_cast %65 : vector<8xf32> to vector<8x1xf32>
    %67 = vector.broadcast %66 : vector<8x1xf32> to vector<8x128xf32>
    %68 = arith.subf %64, %67 : vector<8x128xf32>
    %69 = math.exp %68 : vector<8x128xf32>
    %cst_31 = arith.constant dense<0.000000e+00> : vector<8xf32>
    %70 = vector.multi_reduction <add>, %69, %cst_31 [1] : vector<8x128xf32> to vector<8xf32>
    %71 = vector.shape_cast %70 : vector<8xf32> to vector<8x1xf32>
    %72 = math.log %71 : vector<8x1xf32>
    %73 = vector.broadcast %72 : vector<8x1xf32> to vector<8x128xf32>
    %74 = arith.subf %68, %73 : vector<8x128xf32>
    %c0_32 = arith.constant 0 : index
    %c0_33 = arith.constant 0 : index
    %75 = vector.load %arg10[%c0_32, %c0_33] : memref<8x128xf32, #tpu.memory_space<vmem>>, vector<8x128xf32>
    tpu.vector_store %arg10[%c0_32, %c0_33], %74 {strides = array<i32>} : memref<8x128xf32, #tpu.memory_space<vmem>>, vector<8x128xf32>,
    return
  }
  func.func @transform_0(%arg0: i32) -> (i32, i32) {
    %c0_i32 = arith.constant 0 : i32
    %c0_i32_0 = arith.constant 0 : i32
    return %arg0, %c0_i32 : i32, i32
  }
  func.func @transform_1(%arg0: i32) -> (i32, i32) {
    %c0_i32 = arith.constant 0 : i32
    %c0_i32_0 = arith.constant 0 : i32
    %c0_i32_1 = arith.constant 0 : i32
    return %c0_i32, %c0_i32_0 : i32, i32
  }
  func.func @transform_2(%arg0: i32) -> (i32, i32) {
    %c0_i32 = arith.constant 0 : i32
    %c0_i32_0 = arith.constant 0 : i32
    %c0_i32_1 = arith.constant 0 : i32
    return %c0_i32, %c0_i32_0 : i32, i32
  }
  func.func @transform_3(%arg0: i32) -> (i32, i32, i32) {
    %c0_i32 = arith.constant 0 : i32
    %c0_i32_0 = arith.constant 0 : i32
    %c0_i32_1 = arith.constant 0 : i32
    %c0_i32_2 = arith.constant 0 : i32
    return %c0_i32, %c0_i32_0, %c0_i32_1 : i32, i32, i32
  }
  func.func @transform_4(%arg0: i32) -> (i32, i32) {
    %c0_i32 = arith.constant 0 : i32
    %c0_i32_0 = arith.constant 0 : i32
    %c0_i32_1 = arith.constant 0 : i32
    return %c0_i32, %c0_i32_0 : i32, i32
  }
  func.func @transform_5(%arg0: i32) -> (i32, i32) {
    %c0_i32 = arith.constant 0 : i32
    %c0_i32_0 = arith.constant 0 : i32
    %c0_i32_1 = arith.constant 0 : i32
    return %c0_i32, %c0_i32_0 : i32, i32
  }
  func.func @transform_6(%arg0: i32) -> (i32, i32) {
    %c0_i32 = arith.constant 0 : i32
    %c0_i32_0 = arith.constant 0 : i32
    %c0_i32_1 = arith.constant 0 : i32
    return %c0_i32, %c0_i32_0 : i32, i32
  }
  func.func @transform_7(%arg0: i32) -> (i32, i32) {
    %c0_i32 = arith.constant 0 : i32
    %c0_i32_0 = arith.constant 0 : i32
    %c0_i32_1 = arith.constant 0 : i32
    return %c0_i32, %c0_i32_0 : i32, i32
  }
  func.func @transform_8(%arg0: i32) -> (i32, i32) {
    %c0_i32 = arith.constant 0 : i32
    %c0_i32_0 = arith.constant 0 : i32
    %c0_i32_1 = arith.constant 0 : i32
    return %c0_i32, %c0_i32_0 : i32, i32
  }
  func.func @transform_9(%arg0: i32) -> (i32, i32) {
    %c0_i32 = arith.constant 0 : i32
    %c0_i32_0 = arith.constant 0 : i32
    return %arg0, %c0_i32 : i32, i32
  }
}

</mosaic_0001>

<llo_original>
// kernel: convnet_forward.1
$region0: #{convnet_forward.1}
  #allocation0 [shape = 'u32[]', space=smem, size = 0x4, offset = 0x4, fixed_abs, tag = 'smem constant byte address 0x4 - core index']
  #allocation1 [shape = 'u32[72,128]{1,0:T(1,128)}', space=vmem, size = 0x9000, scoped, tag = 'internal scratch']
  %s0 = inlined_call_operand.vmem [shape: f32[224,28], index: 0, kind: input, shape index: {}]
  %s1 = inlined_call_operand.vmem [shape: bf16[84,208], index: 1, kind: input, shape index: {}]
  %s2 = inlined_call_operand.vmem [shape: f32[1,208], index: 2, kind: input, shape index: {}]
  %s3 = inlined_call_operand.vmem [shape: bf16[3,200,88], index: 3, kind: input, shape index: {}]
  %s4 = inlined_call_operand.vmem [shape: f32[1,88], index: 4, kind: input, shape index: {}]
  %s5 = inlined_call_operand.vmem [shape: bf16[400,64], index: 5, kind: input, shape index: {}]
  %s6 = inlined_call_operand.vmem [shape: f32[1,64], index: 6, kind: input, shape index: {}]
  %s7 = inlined_call_operand.vmem [shape: bf16[64,128], index: 7, kind: input, shape index: {}]
  %s8 = inlined_call_operand.vmem [shape: f32[1,128], index: 8, kind: input, shape index: {}]
  %s9 = inlined_call_operand.vmem [shape: f32[8,128], index: 9, kind: output, shape index: {}]
  %s10 = sld [smem:[#allocation0]]
  $region46: #{convnet_forward.1} parent=0
    _
  %s12 = ssub.s32 1, %s10
  %s13 = scalar_select 0, %s12, %s10
  // Predicated region
  $region2: #{convnet_forward.1} parent=0 // pred_check
    _
  $region3: #{convnet_forward.1} parent=0 // pred_check_branch
    %15 = sbr.rel (0) target = $region5
  $region4: #{convnet_forward.1} parent=0 // pred_region
    _
  $region5: #{convnet_forward.1} parent=0 // pred_fallthru
    _
  // Predicated region
  $region6: #{convnet_forward.1} parent=0 // pred_check
    _
  $region7: #{convnet_forward.1} parent=0 // pred_check_branch
    %17 = sbr.rel (0) target = $region9
  $region8: #{convnet_forward.1} parent=0 // pred_region
    _
  $region9: #{convnet_forward.1} parent=0 // pred_fallthru
    _
  // Predicated region
  $region10: #{convnet_forward.1} parent=0 // pred_check
    _
  $region11: #{convnet_forward.1} parent=0 // pred_check_branch
    %19 = sbr.rel (0) target = $region13
  $region12: #{convnet_forward.1} parent=0 // pred_region
    _
  $region13: #{convnet_forward.1} parent=0 // pred_fallthru
    _
  // Predicated region
  $region14: #{convnet_forward.1} parent=0 // pred_check
    _
  $region15: #{convnet_forward.1} parent=0 // pred_check_branch
    %21 = sbr.rel (0) target = $region17
  $region16: #{convnet_forward.1} parent=0 // pred_region
    _
  $region17: #{convnet_forward.1} parent=0 // pred_fallthru
    _
  // Predicated region
  $region18: #{convnet_forward.1} parent=0 // pred_check
    _
  $region19: #{convnet_forward.1} parent=0 // pred_check_branch
    %23 = sbr.rel (0) target = $region21
  $region20: #{convnet_forward.1} parent=0 // pred_region
    _
  $region21: #{convnet_forward.1} parent=0 // pred_fallthru
    _
  // Predicated region
  $region22: #{convnet_forward.1} parent=0 // pred_check
    _
  $region23: #{convnet_forward.1} parent=0 // pred_check_branch
    %25 = sbr.rel (0) target = $region25
  $region24: #{convnet_forward.1} parent=0 // pred_region
    _
  $region25: #{convnet_forward.1} parent=0 // pred_fallthru
    _
  // Predicated region
  $region26: #{convnet_forward.1} parent=0 // pred_check
    _
  $region27: #{convnet_forward.1} parent=0 // pred_check_branch
    %27 = sbr.rel (0) target = $region29
  $region28: #{convnet_forward.1} parent=0 // pred_region
    _
  $region29: #{convnet_forward.1} parent=0 // pred_fallthru
    _
  // Predicated region
  $region30: #{convnet_forward.1} parent=0 // pred_check
    _
  $region31: #{convnet_forward.1} parent=0 // pred_check_branch
    %29 = sbr.rel (0) target = $region33
  $region32: #{convnet_forward.1} parent=0 // pred_region
    _
  $region33: #{convnet_forward.1} parent=0 // pred_fallthru
    _
  // Predicated region
  $region34: #{convnet_forward.1} parent=0 // pred_check
    _
  $region35: #{convnet_forward.1} parent=0 // pred_check_branch
    %31 = sbr.rel (0) target = $region37
  $region36: #{convnet_forward.1} parent=0 // pred_region
    _
  $region37: #{convnet_forward.1} parent=0 // pred_fallthru
    _
  %v33 = vld [vmem:[%s0] sm:$0xff]
  %v34 = vld [vmem:[%s0 + $0x8] sm:$0xff]
  %v35 = vld [vmem:[%s0 + $0x10] sm:$0xff]
  %v36 = vld [vmem:[%s0 + $0x18] sm:$0xff]
  %v37 = vld [vmem:[%s0 + $0x20] sm:$0xff]
  %v38 = vld [vmem:[%s0 + $0x28] sm:$0xff]
  %v39 = vld [vmem:[%s0 + $0x30] sm:$0xff]
  %v40 = vld [vmem:[%s0 + $0x38] sm:$0xff]
  %v41 = vld [vmem:[%s0 + $0x40] sm:$0xff]
  %v42 = vld [vmem:[%s0 + $0x48] sm:$0xff]
  %v43 = vld [vmem:[%s0 + $0x50] sm:$0xff]
  %v44 = vld [vmem:[%s0 + $0x58] sm:$0xff]
  %v45 = vld [vmem:[%s0 + $0x60] sm:$0xff]
  %v46 = vld [vmem:[%s0 + $0x68] sm:$0xff]
  %v47 = vld [vmem:[%s0 + $0x70] sm:$0xff]
  %v48 = vld [vmem:[%s0 + $0x78] sm:$0xff]
  %v49 = vld [vmem:[%s0 + $0x80] sm:$0xff]
  %v50 = vld [vmem:[%s0 + $0x88] sm:$0xff]
  %v51 = vld [vmem:[%s0 + $0x90] sm:$0xff]
  %v52 = vld [vmem:[%s0 + $0x98] sm:$0xff]
  %v53 = vld [vmem:[%s0 + $0xa0] sm:$0xff]
  %v54 = vld [vmem:[%s0 + $0xa8] sm:$0xff]
  %v55 = vld [vmem:[%s0 + $0xb0] sm:$0xff]
  %v56 = vld [vmem:[%s0 + $0xb8] sm:$0xff]
  %v57 = vld [vmem:[%s0 + $0xc0] sm:$0xff]
  %v58 = vld [vmem:[%s0 + $0xc8] sm:$0xff]
  %v59 = vld [vmem:[%s0 + $0xd0] sm:$0xff]
  %v60 = vld [vmem:[%s0 + $0xd8] sm:$0xff]
  %87 = vrot.lane.b32.xlu0 %v34, 28
  %v88 = vpop.permute.xlu0 %87
  %89 = vrot.lane.b32.xlu0 %v35, 28
  %v90 = vpop.permute.xlu0 %89
  %91 = vrot.lane.b32.xlu0 %v36, 28
  %v92 = vpop.permute.xlu0 %91
  %93 = vrot.lane.b32.xlu0 %v37, 28
  %v94 = vpop.permute.xlu0 %93
  %95 = vrot.lane.b32.xlu0 %v38, 28
  %v96 = vpop.permute.xlu0 %95
  %97 = vrot.lane.b32.xlu0 %v39, 28
  %v98 = vpop.permute.xlu0 %97
  %99 = vrot.lane.b32.xlu0 %v40, 28
  %v100 = vpop.permute.xlu0 %99
  %101 = vrot.lane.b32.xlu0 %v41, 28
  %v102 = vpop.permute.xlu0 %101
  %103 = vrot.lane.b32.xlu0 %v42, 28
  %v104 = vpop.permute.xlu0 %103
  %105 = vrot.lane.b32.xlu0 %v43, 28
  %v106 = vpop.permute.xlu0 %105
  %107 = vrot.lane.b32.xlu0 %v44, 28
  %v108 = vpop.permute.xlu0 %107
  %109 = vrot.lane.b32.xlu0 %v45, 28
  %v110 = vpop.permute.xlu0 %109
  %111 = vrot.lane.b32.xlu0 %v46, 28
  %v112 = vpop.permute.xlu0 %111
  %113 = vrot.lane.b32.xlu0 %v47, 28
  %v114 = vpop.permute.xlu0 %113
  %115 = vrot.lane.b32.xlu0 %v48, 28
  %v116 = vpop.permute.xlu0 %115
  %117 = vrot.lane.b32.xlu0 %v49, 28
  %v118 = vpop.permute.xlu0 %117
  %119 = vrot.lane.b32.xlu0 %v50, 28
  %v120 = vpop.permute.xlu0 %119
  %121 = vrot.lane.b32.xlu0 %v51, 28
  %v122 = vpop.permute.xlu0 %121
  %123 = vrot.lane.b32.xlu0 %v52, 28
  %v124 = vpop.permute.xlu0 %123
  %125 = vrot.lane.b32.xlu0 %v53, 28
  %v126 = vpop.permute.xlu0 %125
  %127 = vrot.lane.b32.xlu0 %v54, 28
  %v128 = vpop.permute.xlu0 %127
  %129 = vrot.lane.b32.xlu0 %v55, 28
  %v130 = vpop.permute.xlu0 %129
  %131 = vrot.lane.b32.xlu0 %v56, 28
  %v132 = vpop.permute.xlu0 %131
  %133 = vrot.lane.b32.xlu0 %v57, 28
  %v134 = vpop.permute.xlu0 %133
  %135 = vrot.lane.b32.xlu0 %v58, 28
  %v136 = vpop.permute.xlu0 %135
  %137 = vrot.lane.b32.xlu0 %v59, 28
  %v138 = vpop.permute.xlu0 %137
  %166 = vrot.lane.b32.xlu0 %v35, 56
  %v167 = vpop.permute.xlu0 %166
  %168 = vrot.lane.b32.xlu0 %v36, 56
  %v169 = vpop.permute.xlu0 %168
  %170 = vrot.lane.b32.xlu0 %v37, 56
  %v171 = vpop.permute.xlu0 %170
  %172 = vrot.lane.b32.xlu0 %v38, 56
  %v173 = vpop.permute.xlu0 %172
  %174 = vrot.lane.b32.xlu0 %v39, 56
  %v175 = vpop.permute.xlu0 %174
  %176 = vrot.lane.b32.xlu0 %v40, 56
  %v177 = vpop.permute.xlu0 %176
  %178 = vrot.lane.b32.xlu0 %v41, 56
  %v179 = vpop.permute.xlu0 %178
  %180 = vrot.lane.b32.xlu0 %v42, 56
  %v181 = vpop.permute.xlu0 %180
  %182 = vrot.lane.b32.xlu0 %v43, 56
  %v183 = vpop.permute.xlu0 %182
  %184 = vrot.lane.b32.xlu0 %v44, 56
  %v185 = vpop.permute.xlu0 %184
  %186 = vrot.lane.b32.xlu0 %v45, 56
  %v187 = vpop.permute.xlu0 %186
  %188 = vrot.lane.b32.xlu0 %v46, 56
  %v189 = vpop.permute.xlu0 %188
  %190 = vrot.lane.b32.xlu0 %v47, 56
  %v191 = vpop.permute.xlu0 %190
  %192 = vrot.lane.b32.xlu0 %v48, 56
  %v193 = vpop.permute.xlu0 %192
  %194 = vrot.lane.b32.xlu0 %v49, 56
  %v195 = vpop.permute.xlu0 %194
  %196 = vrot.lane.b32.xlu0 %v50, 56
  %v197 = vpop.permute.xlu0 %196
  %198 = vrot.lane.b32.xlu0 %v51, 56
  %v199 = vpop.permute.xlu0 %198
  %200 = vrot.lane.b32.xlu0 %v52, 56
  %v201 = vpop.permute.xlu0 %200
  %202 = vrot.lane.b32.xlu0 %v53, 56
  %v203 = vpop.permute.xlu0 %202
  %204 = vrot.lane.b32.xlu0 %v54, 56
  %v205 = vpop.permute.xlu0 %204
  %206 = vrot.lane.b32.xlu0 %v55, 56
  %v207 = vpop.permute.xlu0 %206
  %208 = vrot.lane.b32.xlu0 %v56, 56
  %v209 = vpop.permute.xlu0 %208
  %210 = vrot.lane.b32.xlu0 %v57, 56
  %v211 = vpop.permute.xlu0 %210
  %212 = vrot.lane.b32.xlu0 %v58, 56
  %v213 = vpop.permute.xlu0 %212
  %214 = vrot.lane.b32.xlu0 %v59, 56
  %v215 = vpop.permute.xlu0 %214
  %216 = vrot.lane.b32.xlu0 %v60, 56
  %v217 = vpop.permute.xlu0 %216
  %vm244 = vcmask 228352
  %v245 = vsel %vm244, %v33, %v88
  %v246 = vsel %vm244, %v34, %v90
  %v247 = vsel %vm244, %v35, %v92
  %v248 = vsel %vm244, %v36, %v94
  %v249 = vsel %vm244, %v37, %v96
  %v250 = vsel %vm244, %v38, %v98
  %v251 = vsel %vm244, %v39, %v100
  %v252 = vsel %vm244, %v40, %v102
  %v253 = vsel %vm244, %v41, %v104
  %v254 = vsel %vm244, %v42, %v106
  %v255 = vsel %vm244, %v43, %v108
  %v256 = vsel %vm244, %v44, %v110
  %v257 = vsel %vm244, %v45, %v112
  %v258 = vsel %vm244, %v46, %v114
  %v259 = vsel %vm244, %v47, %v116
  %v260 = vsel %vm244, %v48, %v118
  %v261 = vsel %vm244, %v49, %v120
  %v262 = vsel %vm244, %v50, %v122
  %v263 = vsel %vm244, %v51, %v124
  %v264 = vsel %vm244, %v52, %v126
  %v265 = vsel %vm244, %v53, %v128
  %v266 = vsel %vm244, %v54, %v130
  %v267 = vsel %vm244, %v55, %v132
  %v268 = vsel %vm244, %v56, %v134
  %v269 = vsel %vm244, %v57, %v136
  %v270 = vsel %vm244, %v58, %v138
  %vm271 = vcmask 457728
  %v272 = vsel %vm271, %v245, %v167
  %v273 = vsel %vm271, %v246, %v169
  %v274 = vsel %vm271, %v247, %v171
  %v275 = vsel %vm271, %v248, %v173
  %v276 = vsel %vm271, %v249, %v175
  %v277 = vsel %vm271, %v250, %v177
  %v278 = vsel %vm271, %v251, %v179
  %v279 = vsel %vm271, %v252, %v181
  %v280 = vsel %vm271, %v253, %v183
  %v281 = vsel %vm271, %v254, %v185
  %v282 = vsel %vm271, %v255, %v187
  %v283 = vsel %vm271, %v256, %v189
  %v284 = vsel %vm271, %v257, %v191
  %v285 = vsel %vm271, %v258, %v193
  %v286 = vsel %vm271, %v259, %v195
  %v287 = vsel %vm271, %v260, %v197
  %v288 = vsel %vm271, %v261, %v199
  %v289 = vsel %vm271, %v262, %v201
  %v290 = vsel %vm271, %v263, %v203
  %v291 = vsel %vm271, %v264, %v205
  %v292 = vsel %vm271, %v265, %v207
  %v293 = vsel %vm271, %v266, %v209
  %v294 = vsel %vm271, %v267, %v211
  %v295 = vsel %vm271, %v268, %v213
  %v296 = vsel %vm271, %v269, %v215
  %v297 = vsel %vm271, %v270, %v217
  %v298 = vpack.c.bf16 %v273, %v272
  %v299 = vpack.c.bf16 %v275, %v274
  %v300 = vpack.c.bf16 %v277, %v276
  %v301 = vpack.c.bf16 %v279, %v278
  %v302 = vpack.c.bf16 %v281, %v280
  %v303 = vpack.c.bf16 %v283, %v282
  %v304 = vpack.c.bf16 %v285, %v284
  %v305 = vpack.c.bf16 %v287, %v286
  %v306 = vpack.c.bf16 %v289, %v288
  %v307 = vpack.c.bf16 %v291, %v290
  %v308 = vpack.c.bf16 %v293, %v292
  %v309 = vpack.c.bf16 %v295, %v294
  %v310 = vpack.c.bf16 %v297, %v296
  %v311 = vld [vmem:[%s1] sm:$0xff]
  %v312 = vld [vmem:[%s1 + $0x8] sm:$0xff]
  %v313 = vld [vmem:[%s1 + $0x10] sm:$0xff]
  %v314 = vld [vmem:[%s1 + $0x18] sm:$0xff]
  %v315 = vld [vmem:[%s1 + $0x20] sm:$0xff]
  %v316 = vld [vmem:[%s1 + $0x28] sm:$0xff]
  %v317 = vld [vmem:[%s1 + $0x30] sm:$0xff]
  %v318 = vld [vmem:[%s1 + $0x38] sm:$0xff]
  %v319 = vld [vmem:[%s1 + $0x40] sm:$0xff]
  %v320 = vld [vmem:[%s1 + $0x48] sm:$0xff]
  %v321 = vld [vmem:[%s1 + $0x50] sm:$0x33]
  %v322 = vld [vmem:[%s2] sm:$0x3]
  %v324 = vperm.slane %v322, 0
  %v325 = vperm.slane %v322, 1
  %v339 = vunpack.c.l.b16 %v311
  %v340 = vunpack.c.h.b16 %v311
  %v341 = vunpack.c.l.b16 %v312
  %v342 = vunpack.c.h.b16 %v312
  %v343 = vunpack.c.l.b16 %v313
  %v344 = vunpack.c.h.b16 %v313
  %v345 = vunpack.c.l.b16 %v314
  %v346 = vunpack.c.h.b16 %v314
  %v347 = vunpack.c.l.b16 %v315
  %v348 = vunpack.c.h.b16 %v315
  %v349 = vunpack.c.l.b16 %v316
  %v350 = vunpack.c.h.b16 %v316
  %v351 = vunpack.c.l.b16 %v317
  %v352 = vunpack.c.h.b16 %v317
  %v353 = vunpack.c.l.b16 %v318
  %v354 = vunpack.c.h.b16 %v318
  %v355 = vunpack.c.l.b16 %v319
  %v356 = vunpack.c.h.b16 %v319
  %v357 = vunpack.c.l.b16 %v320
  %v358 = vunpack.c.h.b16 %v320
  %v359 = vunpack.c.l.b16 %v321
  %v360 = vunpack.c.h.b16 %v321
  %v361 = vpack.c.b16 %v341, %v339
  %v362 = vpack.c.b16 %v342, %v340
  %v363 = vpack.c.b16 %v345, %v343
  %v364 = vpack.c.b16 %v346, %v344
  %v365 = vpack.c.b16 %v349, %v347
  %v366 = vpack.c.b16 %v350, %v348
  %v367 = vpack.c.b16 %v353, %v351
  %v368 = vpack.c.b16 %v354, %v352
  %v369 = vpack.c.b16 %v357, %v355
  %v370 = vpack.c.b16 %v358, %v356
  %v371 = vpack.c.b16 %v359, %v359
  %v372 = vpack.c.b16 %v360, %v360
  %vm383 = vcmask 687104
  %v385 = vsel %vm383, %v298, 0
  %v388 = vsel %vm383, %v299, 0
  %v391 = vsel %vm383, %v300, 0
  %v394 = vsel %vm383, %v301, 0
  %v397 = vsel %vm383, %v302, 0
  %v400 = vsel %vm383, %v303, 0
  %v403 = vsel %vm383, %v304, 0
  %v406 = vsel %vm383, %v305, 0
  %v409 = vsel %vm383, %v306, 0
  %v412 = vsel %vm383, %v307, 0
  %v415 = vsel %vm383, %v308, 0
  %v418 = vsel %vm383, %v309, 0
  %v421 = vsel %vm383, %v310, 0
  %vm423 = vcmask 1041408
  %v425 = vsel %vm423, %v371, 0
  %v428 = vsel %vm423, %v372, 0
  %430 = vmatpush.bf16.msra.mxu0 0
  %431 = vmatpush.bf16.msra.mxu0 0
  %432 = vmatpush.bf16.msra.mxu0 %v425
  %433 = vmatpush.bf16.msra.mxu0 %v369
  %434 = vmatpush.bf16.msra.mxu0 %v367
  %435 = vmatpush.bf16.msra.mxu0 %v365
  %436 = vmatpush.bf16.msra.mxu0 %v363
  %437 = vmatpush.bf16.msra.mxu0 %v361
  %438 = vmatmul.bf16.gmra.mxu0 %v385
  %v439 = vpop.f32.mrf.mxu0
  %v440 = vadd.f32 %v324, %v439
  %v441 = vpop.f32.mrf.mxu0
  %v442 = vadd.f32 %v324, %v441
  %443 = vmatmul.bf16.gmra.mxu0 %v388
  %v444 = vpop.f32.mrf.mxu0
  %v445 = vadd.f32 %v324, %v444
  %v446 = vpop.f32.mrf.mxu0
  %v447 = vadd.f32 %v324, %v446
  %448 = vmatmul.bf16.gmra.mxu0 %v391
  %v449 = vpop.f32.mrf.mxu0
  %v450 = vadd.f32 %v324, %v449
  %v451 = vpop.f32.mrf.mxu0
  %v452 = vadd.f32 %v324, %v451
  %453 = vmatmul.bf16.gmra.mxu0 %v394
  %v454 = vpop.f32.mrf.mxu0
  %v455 = vadd.f32 %v324, %v454
  %v456 = vpop.f32.mrf.mxu0
  %v457 = vadd.f32 %v324, %v456
  %458 = vmatmul.bf16.gmra.mxu0 %v397
  %v459 = vpop.f32.mrf.mxu0
  %v460 = vadd.f32 %v324, %v459
  %v461 = vpop.f32.mrf.mxu0
  %v462 = vadd.f32 %v324, %v461
  %463 = vmatmul.bf16.gmra.mxu0 %v400
  %v464 = vpop.f32.mrf.mxu0
  %v465 = vadd.f32 %v324, %v464
  %v466 = vpop.f32.mrf.mxu0
  %v467 = vadd.f32 %v324, %v466
  %468 = vmatmul.bf16.gmra.mxu0 %v403
  %v469 = vpop.f32.mrf.mxu0
  %v470 = vadd.f32 %v324, %v469
  %v471 = vpop.f32.mrf.mxu0
  %v472 = vadd.f32 %v324, %v471
  %473 = vmatmul.bf16.gmra.mxu0 %v406
  %v474 = vpop.f32.mrf.mxu0
  %v475 = vadd.f32 %v324, %v474
  %v476 = vpop.f32.mrf.mxu0
  %v477 = vadd.f32 %v324, %v476
  %478 = vmatmul.bf16.gmra.mxu0 %v409
  %v479 = vpop.f32.mrf.mxu0
  %v480 = vadd.f32 %v324, %v479
  %v481 = vpop.f32.mrf.mxu0
  %v482 = vadd.f32 %v324, %v481
  %483 = vmatmul.bf16.gmra.mxu0 %v412
  %v484 = vpop.f32.mrf.mxu0
  %v485 = vadd.f32 %v324, %v484
  %v486 = vpop.f32.mrf.mxu0
  %v487 = vadd.f32 %v324, %v486
  %488 = vmatmul.bf16.gmra.mxu0 %v415
  %v489 = vpop.f32.mrf.mxu0
  %v490 = vadd.f32 %v324, %v489
  %v491 = vpop.f32.mrf.mxu0
  %v492 = vadd.f32 %v324, %v491
  %493 = vmatmul.bf16.gmra.mxu0 %v418
  %v494 = vpop.f32.mrf.mxu0
  %v495 = vadd.f32 %v324, %v494
  %v496 = vpop.f32.mrf.mxu0
  %v497 = vadd.f32 %v324, %v496
  %498 = vmatmul.bf16.gmra.mxu0 %v421
  %v499 = vpop.f32.mrf.mxu0
  %v500 = vadd.f32 %v324, %v499
  %v501 = vpop.f32.mrf.mxu0
  %v502 = vadd.f32 %v324, %v501
  %503 = vdwg.mxu0
  %504 = vmatpush.bf16.msra.mxu0 0
  %505 = vmatpush.bf16.msra.mxu0 0
  %506 = vmatpush.bf16.msra.mxu0 %v428
  %507 = vmatpush.bf16.msra.mxu0 %v370
  %508 = vmatpush.bf16.msra.mxu0 %v368
  %509 = vmatpush.bf16.msra.mxu0 %v366
  %510 = vmatpush.bf16.msra.mxu0 %v364
  %511 = vmatpush.bf16.msra.mxu0 %v362
  %512 = vmatmul.bf16.gmra.mxu0 %v385
  %v513 = vpop.f32.mrf.mxu0
  %v514 = vadd.f32 %v325, %v513
  %v515 = vpop.f32.mrf.mxu0
  %v516 = vadd.f32 %v325, %v515
  %517 = vmatmul.bf16.gmra.mxu0 %v388
  %v518 = vpop.f32.mrf.mxu0
  %v519 = vadd.f32 %v325, %v518
  %v520 = vpop.f32.mrf.mxu0
  %v521 = vadd.f32 %v325, %v520
  %522 = vmatmul.bf16.gmra.mxu0 %v391
  %v523 = vpop.f32.mrf.mxu0
  %v524 = vadd.f32 %v325, %v523
  %v525 = vpop.f32.mrf.mxu0
  %v526 = vadd.f32 %v325, %v525
  %527 = vmatmul.bf16.gmra.mxu0 %v394
  %v528 = vpop.f32.mrf.mxu0
  %v529 = vadd.f32 %v325, %v528
  %v530 = vpop.f32.mrf.mxu0
  %v531 = vadd.f32 %v325, %v530
  %532 = vmatmul.bf16.gmra.mxu0 %v397
  %v533 = vpop.f32.mrf.mxu0
  %v534 = vadd.f32 %v325, %v533
  %v535 = vpop.f32.mrf.mxu0
  %v536 = vadd.f32 %v325, %v535
  %537 = vmatmul.bf16.gmra.mxu0 %v400
  %v538 = vpop.f32.mrf.mxu0
  %v539 = vadd.f32 %v325, %v538
  %v540 = vpop.f32.mrf.mxu0
  %v541 = vadd.f32 %v325, %v540
  %542 = vmatmul.bf16.gmra.mxu0 %v403
  %v543 = vpop.f32.mrf.mxu0
  %v544 = vadd.f32 %v325, %v543
  %v545 = vpop.f32.mrf.mxu0
  %v546 = vadd.f32 %v325, %v545
  %547 = vmatmul.bf16.gmra.mxu0 %v406
  %v548 = vpop.f32.mrf.mxu0
  %v549 = vadd.f32 %v325, %v548
  %v550 = vpop.f32.mrf.mxu0
  %v551 = vadd.f32 %v325, %v550
  %552 = vmatmul.bf16.gmra.mxu0 %v409
  %v553 = vpop.f32.mrf.mxu0
  %v554 = vadd.f32 %v325, %v553
  %v555 = vpop.f32.mrf.mxu0
  %v556 = vadd.f32 %v325, %v555
  %557 = vmatmul.bf16.gmra.mxu0 %v412
  %v558 = vpop.f32.mrf.mxu0
  %v559 = vadd.f32 %v325, %v558
  %v560 = vpop.f32.mrf.mxu0
  %v561 = vadd.f32 %v325, %v560
  %562 = vmatmul.bf16.gmra.mxu0 %v415
  %v563 = vpop.f32.mrf.mxu0
  %v564 = vadd.f32 %v325, %v563
  %v565 = vpop.f32.mrf.mxu0
  %v566 = vadd.f32 %v325, %v565
  %567 = vmatmul.bf16.gmra.mxu0 %v418
  %v568 = vpop.f32.mrf.mxu0
  %v569 = vadd.f32 %v325, %v568
  %v570 = vpop.f32.mrf.mxu0
  %v571 = vadd.f32 %v325, %v570
  %572 = vmatmul.bf16.gmra.mxu0 %v421
  %v573 = vpop.f32.mrf.mxu0
  %v574 = vadd.f32 %v325, %v573
  %v575 = vpop.f32.mrf.mxu0
  %v576 = vadd.f32 %v325, %v575
  %577 = vdwg.mxu0
  %v578 = vmax.f32 %v440, 0.0
  %v579 = vmax.f32 %v514, 0.0
  %v580 = vmax.f32 %v442, 0.0
  %v581 = vmax.f32 %v516, 0.0
  %v582 = vmax.f32 %v445, 0.0
  %v583 = vmax.f32 %v519, 0.0
  %v584 = vmax.f32 %v447, 0.0
  %v585 = vmax.f32 %v521, 0.0
  %v586 = vmax.f32 %v450, 0.0
  %v587 = vmax.f32 %v524, 0.0
  %v588 = vmax.f32 %v452, 0.0
  %v589 = vmax.f32 %v526, 0.0
  %v590 = vmax.f32 %v455, 0.0
  %v591 = vmax.f32 %v529, 0.0
  %v592 = vmax.f32 %v457, 0.0
  %v593 = vmax.f32 %v531, 0.0
  %v594 = vmax.f32 %v460, 0.0
  %v595 = vmax.f32 %v534, 0.0
  %v596 = vmax.f32 %v462, 0.0
  %v597 = vmax.f32 %v536, 0.0
  %v598 = vmax.f32 %v465, 0.0
  %v599 = vmax.f32 %v539, 0.0
  %v600 = vmax.f32 %v467, 0.0
  %v601 = vmax.f32 %v541, 0.0
  %v602 = vmax.f32 %v470, 0.0
  %v603 = vmax.f32 %v544, 0.0
  %v604 = vmax.f32 %v472, 0.0
  %v605 = vmax.f32 %v546, 0.0
  %v606 = vmax.f32 %v475, 0.0
  %v607 = vmax.f32 %v549, 0.0
  %v608 = vmax.f32 %v477, 0.0
  %v609 = vmax.f32 %v551, 0.0
  %v610 = vmax.f32 %v480, 0.0
  %v611 = vmax.f32 %v554, 0.0
  %v612 = vmax.f32 %v482, 0.0
  %v613 = vmax.f32 %v556, 0.0
  %v614 = vmax.f32 %v485, 0.0
  %v615 = vmax.f32 %v559, 0.0
  %v616 = vmax.f32 %v487, 0.0
  %v617 = vmax.f32 %v561, 0.0
  %v618 = vmax.f32 %v490, 0.0
  %v619 = vmax.f32 %v564, 0.0
  %v620 = vmax.f32 %v492, 0.0
  %v621 = vmax.f32 %v566, 0.0
  %v622 = vmax.f32 %v495, 0.0
  %v623 = vmax.f32 %v569, 0.0
  %v624 = vmax.f32 %v497, 0.0
  %v625 = vmax.f32 %v571, 0.0
  %v626 = vmax.f32 %v500, 0.0
  %v627 = vmax.f32 %v574, 0.0
  %v628 = vmax.f32 %v502, 0.0
  %v629 = vmax.f32 %v576, 0.0
  %v630 = vmax.f32 %v578, %v580
  %v631 = vmax.f32 %v579, %v581
  %v632 = vmax.f32 %v580, %v582
  %v633 = vmax.f32 %v581, %v583
  %v634 = vmax.f32 %v582, %v584
  %v635 = vmax.f32 %v583, %v585
  %v636 = vmax.f32 %v584, %v586
  %v637 = vmax.f32 %v585, %v587
  %v638 = vmax.f32 %v586, %v588
  %v639 = vmax.f32 %v587, %v589
  %v640 = vmax.f32 %v588, %v590
  %v641 = vmax.f32 %v589, %v591
  %v642 = vmax.f32 %v590, %v592
  %v643 = vmax.f32 %v591, %v593
  %v644 = vmax.f32 %v592, %v594
  %v645 = vmax.f32 %v593, %v595
  %v646 = vmax.f32 %v594, %v596
  %v647 = vmax.f32 %v595, %v597
  %v648 = vmax.f32 %v596, %v598
  %v649 = vmax.f32 %v597, %v599
  %v650 = vmax.f32 %v598, %v600
  %v651 = vmax.f32 %v599, %v601
  %v652 = vmax.f32 %v600, %v602
  %v653 = vmax.f32 %v601, %v603
  %v654 = vmax.f32 %v602, %v604
  %v655 = vmax.f32 %v603, %v605
  %v656 = vmax.f32 %v604, %v606
  %v657 = vmax.f32 %v605, %v607
  %v658 = vmax.f32 %v606, %v608
  %v659 = vmax.f32 %v607, %v609
  %v660 = vmax.f32 %v608, %v610
  %v661 = vmax.f32 %v609, %v611
  %v662 = vmax.f32 %v610, %v612
  %v663 = vmax.f32 %v611, %v613
  %v664 = vmax.f32 %v612, %v614
  %v665 = vmax.f32 %v613, %v615
  %v666 = vmax.f32 %v614, %v616
  %v667 = vmax.f32 %v615, %v617
  %v668 = vmax.f32 %v616, %v618
  %v669 = vmax.f32 %v617, %v619
  %v670 = vmax.f32 %v618, %v620
  %v671 = vmax.f32 %v619, %v621
  %v672 = vmax.f32 %v620, %v622
  %v673 = vmax.f32 %v621, %v623
  %v674 = vmax.f32 %v622, %v624
  %v675 = vmax.f32 %v623, %v625
  %v676 = vmax.f32 %v624, %v626
  %v677 = vmax.f32 %v625, %v627
  %v678 = vmax.f32 %v626, %v628
  %v679 = vmax.f32 %v627, %v629
  %730 = vrot.lane.b32.xlu0 %v630, 120
  %v731 = vpop.permute.xlu0 %730
  %732 = vrot.lane.b32.xlu0 %v631, 120
  %v733 = vpop.permute.xlu0 %732
  %734 = vrot.lane.b32.xlu0 %v632, 120
  %v735 = vpop.permute.xlu0 %734
  %736 = vrot.lane.b32.xlu0 %v633, 120
  %v737 = vpop.permute.xlu0 %736
  %738 = vrot.lane.b32.xlu0 %v634, 120
  %v739 = vpop.permute.xlu0 %738
  %740 = vrot.lane.b32.xlu0 %v635, 120
  %v741 = vpop.permute.xlu0 %740
  %742 = vrot.lane.b32.xlu0 %v636, 120
  %v743 = vpop.permute.xlu0 %742
  %744 = vrot.lane.b32.xlu0 %v637, 120
  %v745 = vpop.permute.xlu0 %744
  %746 = vrot.lane.b32.xlu0 %v638, 120
  %v747 = vpop.permute.xlu0 %746
  %748 = vrot.lane.b32.xlu0 %v639, 120
  %v749 = vpop.permute.xlu0 %748
  %750 = vrot.lane.b32.xlu0 %v640, 120
  %v751 = vpop.permute.xlu0 %750
  %752 = vrot.lane.b32.xlu0 %v641, 120
  %v753 = vpop.permute.xlu0 %752
  %754 = vrot.lane.b32.xlu0 %v642, 120
  %v755 = vpop.permute.xlu0 %754
  %756 = vrot.lane.b32.xlu0 %v643, 120
  %v757 = vpop.permute.xlu0 %756
  %758 = vrot.lane.b32.xlu0 %v644, 120
  %v759 = vpop.permute.xlu0 %758
  %760 = vrot.lane.b32.xlu0 %v645, 120
  %v761 = vpop.permute.xlu0 %760
  %762 = vrot.lane.b32.xlu0 %v646, 120
  %v763 = vpop.permute.xlu0 %762
  %764 = vrot.lane.b32.xlu0 %v647, 120
  %v765 = vpop.permute.xlu0 %764
  %766 = vrot.lane.b32.xlu0 %v648, 120
  %v767 = vpop.permute.xlu0 %766
  %768 = vrot.lane.b32.xlu0 %v649, 120
  %v769 = vpop.permute.xlu0 %768
  %770 = vrot.lane.b32.xlu0 %v650, 120
  %v771 = vpop.permute.xlu0 %770
  %772 = vrot.lane.b32.xlu0 %v651, 120
  %v773 = vpop.permute.xlu0 %772
  %774 = vrot.lane.b32.xlu0 %v652, 120
  %v775 = vpop.permute.xlu0 %774
  %776 = vrot.lane.b32.xlu0 %v653, 120
  %v777 = vpop.permute.xlu0 %776
  %778 = vrot.lane.b32.xlu0 %v654, 120
  %v779 = vpop.permute.xlu0 %778
  %780 = vrot.lane.b32.xlu0 %v655, 120
  %v781 = vpop.permute.xlu0 %780
  %782 = vrot.lane.b32.xlu0 %v656, 120
  %v783 = vpop.permute.xlu0 %782
  %784 = vrot.lane.b32.xlu0 %v657, 120
  %v785 = vpop.permute.xlu0 %784
  %786 = vrot.lane.b32.xlu0 %v658, 120
  %v787 = vpop.permute.xlu0 %786
  %788 = vrot.lane.b32.xlu0 %v659, 120
  %v789 = vpop.permute.xlu0 %788
  %790 = vrot.lane.b32.xlu0 %v660, 120
  %v791 = vpop.permute.xlu0 %790
  %792 = vrot.lane.b32.xlu0 %v661, 120
  %v793 = vpop.permute.xlu0 %792
  %794 = vrot.lane.b32.xlu0 %v662, 120
  %v795 = vpop.permute.xlu0 %794
  %796 = vrot.lane.b32.xlu0 %v663, 120
  %v797 = vpop.permute.xlu0 %796
  %798 = vrot.lane.b32.xlu0 %v664, 120
  %v799 = vpop.permute.xlu0 %798
  %800 = vrot.lane.b32.xlu0 %v665, 120
  %v801 = vpop.permute.xlu0 %800
  %802 = vrot.lane.b32.xlu0 %v666, 120
  %v803 = vpop.permute.xlu0 %802
  %804 = vrot.lane.b32.xlu0 %v667, 120
  %v805 = vpop.permute.xlu0 %804
  %806 = vrot.lane.b32.xlu0 %v668, 120
  %v807 = vpop.permute.xlu0 %806
  %808 = vrot.lane.b32.xlu0 %v669, 120
  %v809 = vpop.permute.xlu0 %808
  %810 = vrot.lane.b32.xlu0 %v670, 120
  %v811 = vpop.permute.xlu0 %810
  %812 = vrot.lane.b32.xlu0 %v671, 120
  %v813 = vpop.permute.xlu0 %812
  %814 = vrot.lane.b32.xlu0 %v672, 120
  %v815 = vpop.permute.xlu0 %814
  %816 = vrot.lane.b32.xlu0 %v673, 120
  %v817 = vpop.permute.xlu0 %816
  %818 = vrot.lane.b32.xlu0 %v674, 120
  %v819 = vpop.permute.xlu0 %818
  %820 = vrot.lane.b32.xlu0 %v675, 120
  %v821 = vpop.permute.xlu0 %820
  %822 = vrot.lane.b32.xlu0 %v676, 120
  %v823 = vpop.permute.xlu0 %822
  %824 = vrot.lane.b32.xlu0 %v677, 120
  %v825 = vpop.permute.xlu0 %824
  %826 = vrot.lane.b32.xlu0 %v678, 120
  %v827 = vpop.permute.xlu0 %826
  %828 = vrot.lane.b32.xlu0 %v679, 120
  %v829 = vpop.permute.xlu0 %828
  %vm830 = vcmask 982016
  %v831 = vsel %vm830, %v731, %v733
  %v832 = vsel %vm830, %v735, %v737
  %v833 = vsel %vm830, %v739, %v741
  %v834 = vsel %vm830, %v743, %v745
  %v835 = vsel %vm830, %v747, %v749
  %v836 = vsel %vm830, %v751, %v753
  %v837 = vsel %vm830, %v755, %v757
  %v838 = vsel %vm830, %v759, %v761
  %v839 = vsel %vm830, %v763, %v765
  %v840 = vsel %vm830, %v767, %v769
  %v841 = vsel %vm830, %v771, %v773
  %v842 = vsel %vm830, %v775, %v777
  %v843 = vsel %vm830, %v779, %v781
  %v844 = vsel %vm830, %v783, %v785
  %v845 = vsel %vm830, %v787, %v789
  %v846 = vsel %vm830, %v791, %v793
  %v847 = vsel %vm830, %v795, %v797
  %v848 = vsel %vm830, %v799, %v801
  %v849 = vsel %vm830, %v803, %v805
  %v850 = vsel %vm830, %v807, %v809
  %v851 = vsel %vm830, %v811, %v813
  %v852 = vsel %vm830, %v815, %v817
  %v853 = vsel %vm830, %v819, %v821
  %v854 = vsel %vm830, %v823, %v825
  %v855 = vsel %vm830, %v827, %v829
  %v906 = vmax.f32 %v630, %v831
  %v907 = vmax.f32 %v631, %v733
  %v908 = vmax.f32 %v632, %v832
  %v909 = vmax.f32 %v633, %v737
  %v910 = vmax.f32 %v634, %v833
  %v911 = vmax.f32 %v635, %v741
  %v912 = vmax.f32 %v636, %v834
  %v913 = vmax.f32 %v637, %v745
  %v914 = vmax.f32 %v638, %v835
  %v915 = vmax.f32 %v639, %v749
  %v916 = vmax.f32 %v640, %v836
  %v917 = vmax.f32 %v641, %v753
  %v918 = vmax.f32 %v642, %v837
  %v919 = vmax.f32 %v643, %v757
  %v920 = vmax.f32 %v644, %v838
  %v921 = vmax.f32 %v645, %v761
  %v922 = vmax.f32 %v646, %v839
  %v923 = vmax.f32 %v647, %v765
  %v924 = vmax.f32 %v648, %v840
  %v925 = vmax.f32 %v649, %v769
  %v926 = vmax.f32 %v650, %v841
  %v927 = vmax.f32 %v651, %v773
  %v928 = vmax.f32 %v652, %v842
  %v929 = vmax.f32 %v653, %v777
  %v930 = vmax.f32 %v654, %v843
  %v931 = vmax.f32 %v655, %v781
  %v932 = vmax.f32 %v656, %v844
  %v933 = vmax.f32 %v657, %v785
  %v934 = vmax.f32 %v658, %v845
  %v935 = vmax.f32 %v659, %v789
  %v936 = vmax.f32 %v660, %v846
  %v937 = vmax.f32 %v661, %v793
  %v938 = vmax.f32 %v662, %v847
  %v939 = vmax.f32 %v663, %v797
  %v940 = vmax.f32 %v664, %v848
  %v941 = vmax.f32 %v665, %v801
  %v942 = vmax.f32 %v666, %v849
  %v943 = vmax.f32 %v667, %v805
  %v944 = vmax.f32 %v668, %v850
  %v945 = vmax.f32 %v669, %v809
  %v946 = vmax.f32 %v670, %v851
  %v947 = vmax.f32 %v671, %v813
  %v948 = vmax.f32 %v672, %v852
  %v949 = vmax.f32 %v673, %v817
  %v950 = vmax.f32 %v674, %v853
  %v951 = vmax.f32 %v675, %v821
  %v952 = vmax.f32 %v676, %v854
  %v953 = vmax.f32 %v677, %v825
  %v954 = vmax.f32 %v678, %v855
  %v955 = vmax.f32 %v679, %v829
  %v956 = vpack.c.bf16 %v907, %v906
  %v957 = vpack.c.bf16 %v909, %v908
  %v958 = vpack.c.bf16 %v911, %v910
  %v959 = vpack.c.bf16 %v913, %v912
  %v960 = vpack.c.bf16 %v915, %v914
  %v961 = vpack.c.bf16 %v917, %v916
  %v962 = vpack.c.bf16 %v919, %v918
  %v963 = vpack.c.bf16 %v921, %v920
  %v964 = vpack.c.bf16 %v923, %v922
  %v965 = vpack.c.bf16 %v925, %v924
  %v966 = vpack.c.bf16 %v927, %v926
  %v967 = vpack.c.bf16 %v929, %v928
  %v968 = vpack.c.bf16 %v931, %v930
  %v969 = vpack.c.bf16 %v933, %v932
  %v970 = vpack.c.bf16 %v935, %v934
  %v971 = vpack.c.bf16 %v937, %v936
  %v972 = vpack.c.bf16 %v939, %v938
  %v973 = vpack.c.bf16 %v941, %v940
  %v974 = vpack.c.bf16 %v943, %v942
  %v975 = vpack.c.bf16 %v945, %v944
  %v976 = vpack.c.bf16 %v947, %v946
  %v977 = vpack.c.bf16 %v949, %v948
  %v978 = vpack.c.bf16 %v951, %v950
  %v979 = vpack.c.bf16 %v953, %v952
  %v980 = vpack.c.bf16 %v955, %v954
  %v981 = vld [vmem:[%s3] sm:$0xf]
  %v982 = vld [vmem:[%s3 + $0x4] sm:$0xf]
  %v983 = vld [vmem:[%s3 + $0x8] sm:$0xf]
  %v984 = vld [vmem:[%s3 + $0xc] sm:$0xf]
  %v985 = vld [vmem:[%s3 + $0x10] sm:$0xf]
  %v986 = vld [vmem:[%s3 + $0x14] sm:$0xf]
  %v987 = vld [vmem:[%s3 + $0x18] sm:$0xf]
  %v988 = vld [vmem:[%s3 + $0x1c] sm:$0xf]
  %v989 = vld [vmem:[%s3 + $0x20] sm:$0xf]
  %v990 = vld [vmem:[%s3 + $0x24] sm:$0xf]
  %v991 = vld [vmem:[%s3 + $0x28] sm:$0xf]
  %v992 = vld [vmem:[%s3 + $0x2c] sm:$0xf]
  %v993 = vld [vmem:[%s3 + $0x30] sm:$0xf]
  %v994 = vld [vmem:[%s3 + $0x34] sm:$0xf]
  %v995 = vld [vmem:[%s3 + $0x38] sm:$0xf]
  %v996 = vld [vmem:[%s3 + $0x3c] sm:$0xf]
  %v997 = vld [vmem:[%s3 + $0x40] sm:$0xf]
  %v998 = vld [vmem:[%s3 + $0x44] sm:$0xf]
  %v999 = vld [vmem:[%s3 + $0x48] sm:$0xf]
  %v1000 = vld [vmem:[%s3 + $0x4c] sm:$0xf]
  %v1001 = vld [vmem:[%s3 + $0x50] sm:$0xf]
  %v1002 = vld [vmem:[%s3 + $0x54] sm:$0xf]
  %v1003 = vld [vmem:[%s3 + $0x58] sm:$0xf]
  %v1004 = vld [vmem:[%s3 + $0x5c] sm:$0xf]
  %v1005 = vld [vmem:[%s3 + $0x60] sm:$0xf]
  %s1006 = scalar_lea.vmem %s3, 100
  %v1007 = vld [vmem:[%s1006] sm:$0xf]
  %v1008 = vld [vmem:[%s1006 + $0x4] sm:$0xf]
  %v1009 = vld [vmem:[%s1006 + $0x8] sm:$0xf]
  %v1010 = vld [vmem:[%s1006 + $0xc] sm:$0xf]
  %v1011 = vld [vmem:[%s1006 + $0x10] sm:$0xf]
  %v1012 = vld [vmem:[%s1006 + $0x14] sm:$0xf]
  %v1013 = vld [vmem:[%s1006 + $0x18] sm:$0xf]
  %v1014 = vld [vmem:[%s1006 + $0x1c] sm:$0xf]
  %v1015 = vld [vmem:[%s1006 + $0x20] sm:$0xf]
  %v1016 = vld [vmem:[%s1006 + $0x24] sm:$0xf]
  %v1017 = vld [vmem:[%s1006 + $0x28] sm:$0xf]
  %v1018 = vld [vmem:[%s1006 + $0x2c] sm:$0xf]
  %v1019 = vld [vmem:[%s1006 + $0x30] sm:$0xf]
  %v1020 = vld [vmem:[%s1006 + $0x34] sm:$0xf]
  %v1021 = vld [vmem:[%s1006 + $0x38] sm:$0xf]
  %v1022 = vld [vmem:[%s1006 + $0x3c] sm:$0xf]
  %v1023 = vld [vmem:[%s1006 + $0x40] sm:$0xf]
  %v1024 = vld [vmem:[%s1006 + $0x44] sm:$0xf]
  %v1025 = vld [vmem:[%s1006 + $0x48] sm:$0xf]
  %v1026 = vld [vmem:[%s1006 + $0x4c] sm:$0xf]
  %v1027 = vld [vmem:[%s1006 + $0x50] sm:$0xf]
  %v1028 = vld [vmem:[%s1006 + $0x54] sm:$0xf]
  %v1029 = vld [vmem:[%s1006 + $0x58] sm:$0xf]
  %v1030 = vld [vmem:[%s1006 + $0x5c] sm:$0xf]
  %v1031 = vld [vmem:[%s1006 + $0x60] sm:$0xf]
  %v1053 = vunpack.c.l.b16 %v958
  %v1054 = vunpack.c.h.b16 %v958
  %v1055 = vunpack.c.l.b16 %v959
  %v1056 = vunpack.c.h.b16 %v959
  %v1057 = vunpack.c.l.b16 %v960
  %v1058 = vunpack.c.h.b16 %v960
  %v1059 = vunpack.c.l.b16 %v961
  %v1060 = vunpack.c.h.b16 %v961
  %v1061 = vunpack.c.l.b16 %v962
  %v1062 = vunpack.c.h.b16 %v962
  %v1063 = vunpack.c.l.b16 %v963
  %v1064 = vunpack.c.h.b16 %v963
  %v1065 = vunpack.c.l.b16 %v964
  %v1066 = vunpack.c.h.b16 %v964
  %v1067 = vunpack.c.l.b16 %v965
  %v1068 = vunpack.c.h.b16 %v965
  %v1069 = vunpack.c.l.b16 %v966
  %v1070 = vunpack.c.h.b16 %v966
  %v1071 = vunpack.c.l.b16 %v967
  %v1072 = vunpack.c.h.b16 %v967
  %v1073 = vunpack.c.l.b16 %v968
  %v1074 = vunpack.c.h.b16 %v968
  %v1075 = vunpack.c.l.b16 %v969
  %v1076 = vunpack.c.h.b16 %v969
  %v1077 = vunpack.c.l.b16 %v970
  %v1078 = vunpack.c.h.b16 %v970
  %v1079 = vunpack.c.l.b16 %v971
  %v1080 = vunpack.c.h.b16 %v971
  %v1081 = vunpack.c.l.b16 %v972
  %v1082 = vunpack.c.h.b16 %v972
  %v1083 = vunpack.c.l.b16 %v973
  %v1084 = vunpack.c.h.b16 %v973
  %v1085 = vunpack.c.l.b16 %v974
  %v1086 = vunpack.c.h.b16 %v974
  %v1087 = vunpack.c.l.b16 %v975
  %v1088 = vunpack.c.h.b16 %v975
  %v1089 = vunpack.c.l.b16 %v976
  %v1090 = vunpack.c.h.b16 %v976
  %v1091 = vunpack.c.l.b16 %v977
  %v1092 = vunpack.c.h.b16 %v977
  %v1093 = vunpack.c.l.b16 %v978
  %v1094 = vunpack.c.h.b16 %v978
  %v1095 = vpack.c.b16 %v1055, %v1053
  %v1096 = vpack.c.b16 %v1056, %v1054
  %v1097 = vpack.c.b16 %v1059, %v1057
  %v1098 = vpack.c.b16 %v1060, %v1058
  %v1099 = vpack.c.b16 %v1063, %v1061
  %v1100 = vpack.c.b16 %v1064, %v1062
  %v1101 = vpack.c.b16 %v1067, %v1065
  %v1102 = vpack.c.b16 %v1068, %v1066
  %v1103 = vpack.c.b16 %v1071, %v1069
  %v1104 = vpack.c.b16 %v1072, %v1070
  %v1105 = vpack.c.b16 %v1075, %v1073
  %v1106 = vpack.c.b16 %v1076, %v1074
  %v1107 = vpack.c.b16 %v1079, %v1077
  %v1108 = vpack.c.b16 %v1080, %v1078
  %v1109 = vpack.c.b16 %v1083, %v1081
  %v1110 = vpack.c.b16 %v1084, %v1082
  %v1111 = vpack.c.b16 %v1087, %v1085
  %v1112 = vpack.c.b16 %v1088, %v1086
  %v1113 = vpack.c.b16 %v1091, %v1089
  %v1114 = vpack.c.b16 %v1092, %v1090
  %v1115 = vpack.c.b16 %v1093, %v1093
  %v1116 = vpack.c.b16 %v1094, %v1094
  %v1153 = vunpack.c.l.b16 %v1007
  %v1154 = vunpack.c.l.b16 %v1008
  %v1155 = vunpack.c.l.b16 %v1009
  %v1156 = vunpack.c.l.b16 %v1010
  %v1157 = vunpack.c.l.b16 %v1011
  %v1158 = vunpack.c.l.b16 %v1012
  %v1159 = vunpack.c.l.b16 %v1013
  %v1160 = vunpack.c.l.b16 %v1014
  %v1161 = vunpack.c.l.b16 %v1015
  %v1162 = vunpack.c.l.b16 %v1016
  %v1163 = vunpack.c.l.b16 %v1017
  %v1164 = vunpack.c.l.b16 %v1018
  %v1165 = vunpack.c.l.b16 %v1019
  %v1166 = vunpack.c.l.b16 %v1020
  %v1167 = vunpack.c.l.b16 %v1021
  %v1168 = vunpack.c.l.b16 %v1022
  %v1169 = vunpack.c.l.b16 %v1023
  %v1170 = vunpack.c.l.b16 %v1024
  %v1171 = vunpack.c.l.b16 %v1025
  %v1172 = vunpack.c.l.b16 %v1026
  %v1173 = vunpack.c.l.b16 %v1027
  %v1174 = vunpack.c.l.b16 %v1028
  %v1175 = vunpack.c.l.b16 %v1029
  %v1176 = vunpack.c.l.b16 %v1030
  %v1177 = vunpack.c.l.b16 %v1031
  %v1178 = vpack.c.b16 %v1154, %v1153
  %v1179 = vpack.c.b16 %v1156, %v1155
  %v1180 = vpack.c.b16 %v1158, %v1157
  %v1181 = vpack.c.b16 %v1160, %v1159
  %v1182 = vpack.c.b16 %v1162, %v1161
  %v1183 = vpack.c.b16 %v1164, %v1163
  %v1184 = vpack.c.b16 %v1166, %v1165
  %v1185 = vpack.c.b16 %v1168, %v1167
  %v1186 = vpack.c.b16 %v1170, %v1169
  %v1187 = vpack.c.b16 %v1172, %v1171
  %v1188 = vpack.c.b16 %v1174, %v1173
  %v1189 = vpack.c.b16 %v1176, %v1175
  %v1190 = vpack.c.b16 %v1177, %v1177
  %vm1203 = vcmask 588800
  %v1205 = vsel %vm1203, %v1096, 0
  %v1208 = vsel %vm1203, %v1098, 0
  %v1211 = vsel %vm1203, %v1100, 0
  %v1214 = vsel %vm1203, %v1102, 0
  %v1217 = vsel %vm1203, %v1104, 0
  %v1220 = vsel %vm1203, %v1106, 0
  %v1223 = vsel %vm1203, %v1108, 0
  %v1226 = vsel %vm1203, %v1110, 0
  %v1229 = vsel %vm1203, %v1112, 0
  %v1232 = vsel %vm1203, %v1114, 0
  %v1235 = vsel %vm1203, %v1116, 0
  %vm1237 = vcmask 1043456
  %v1239 = vsel %vm1237, %v1190, 0
  %1241 = vmatpush.bf16.msra.mxu0 %v1185
  %1242 = vmatpush.bf16.msra.mxu0 %v1184
  %1243 = vmatpush.bf16.msra.mxu0 %v1183
  %1244 = vmatpush.bf16.msra.mxu0 %v1182
  %1245 = vmatpush.bf16.msra.mxu0 %v1181
  %1246 = vmatpush.bf16.msra.mxu0 %v1180
  %1247 = vmatpush.bf16.msra.mxu0 %v1179
  %1248 = vmatpush.bf16.msra.mxu0 %v1178
  %1249 = vmatmul.bf16.gmra.mxu0 %v1095
  %v1250 = vpop.f32.mrf.mxu0
  %v1251 = vadd.f32 0.0, %v1250
  %v1252 = vpop.f32.mrf.mxu0
  %1253 = vmatmul.bf16.gmra.mxu0 %v1097
  %v1254 = vpop.f32.mrf.mxu0
  %v1255 = vadd.f32 0.0, %v1254
  %v1256 = vpop.f32.mrf.mxu0
  %1257 = vmatmul.bf16.gmra.mxu0 %v1099
  %v1258 = vpop.f32.mrf.mxu0
  %v1259 = vadd.f32 0.0, %v1258
  %v1260 = vpop.f32.mrf.mxu0
  %1261 = vmatmul.bf16.gmra.mxu0 %v1101
  %v1262 = vpop.f32.mrf.mxu0
  %v1263 = vadd.f32 0.0, %v1262
  %v1264 = vpop.f32.mrf.mxu0
  %1265 = vmatmul.bf16.gmra.mxu0 %v1103
  %v1266 = vpop.f32.mrf.mxu0
  %v1267 = vadd.f32 0.0, %v1266
  %v1268 = vpop.f32.mrf.mxu0
  %1269 = vmatmul.bf16.gmra.mxu0 %v1105
  %v1270 = vpop.f32.mrf.mxu0
  %v1271 = vadd.f32 0.0, %v1270
  %v1272 = vpop.f32.mrf.mxu0
  %1273 = vmatmul.bf16.gmra.mxu0 %v1107
  %v1274 = vpop.f32.mrf.mxu0
  %v1275 = vadd.f32 0.0, %v1274
  %v1276 = vpop.f32.mrf.mxu0
  %1277 = vmatmul.bf16.gmra.mxu0 %v1109
  %v1278 = vpop.f32.mrf.mxu0
  %v1279 = vadd.f32 0.0, %v1278
  %v1280 = vpop.f32.mrf.mxu0
  %1281 = vmatmul.bf16.gmra.mxu0 %v1111
  %v1282 = vpop.f32.mrf.mxu0
  %v1283 = vadd.f32 0.0, %v1282
  %v1284 = vpop.f32.mrf.mxu0
  %1285 = vmatmul.bf16.gmra.mxu0 %v1113
  %v1286 = vpop.f32.mrf.mxu0
  %v1287 = vadd.f32 0.0, %v1286
  %v1288 = vpop.f32.mrf.mxu0
  %1289 = vmatmul.bf16.gmra.mxu0 %v1115
  %v1290 = vpop.f32.mrf.mxu0
  %v1291 = vpop.f32.mrf.mxu0
  %1292 = vdwg.mxu0
  %1293 = vmatpush.bf16.msra.mxu0 0
  %1294 = vmatpush.bf16.msra.mxu0 0
  %1295 = vmatpush.bf16.msra.mxu0 0
  %1296 = vmatpush.bf16.msra.mxu0 %v1239
  %1297 = vmatpush.bf16.msra.mxu0 %v1189
  %1298 = vmatpush.bf16.msra.mxu0 %v1188
  %1299 = vmatpush.bf16.msra.mxu0 %v1187
  %1300 = vmatpush.bf16.msra.mxu0 %v1186
  %1301 = vmatmul.bf16.gmra.mxu0 %v1205
  %v1302 = vpop.f32.mrf.mxu0
  %v1303 = vadd.f32 %v1251, %v1302
  %v1304 = vpop.f32.mrf.mxu0
  %1305 = vmatmul.bf16.gmra.mxu0 %v1208
  %v1306 = vpop.f32.mrf.mxu0
  %v1307 = vadd.f32 %v1255, %v1306
  %v1308 = vpop.f32.mrf.mxu0
  %1309 = vmatmul.bf16.gmra.mxu0 %v1211
  %v1310 = vpop.f32.mrf.mxu0
  %v1311 = vadd.f32 %v1259, %v1310
  %v1312 = vpop.f32.mrf.mxu0
  %1313 = vmatmul.bf16.gmra.mxu0 %v1214
  %v1314 = vpop.f32.mrf.mxu0
  %v1315 = vadd.f32 %v1263, %v1314
  %v1316 = vpop.f32.mrf.mxu0
  %1317 = vmatmul.bf16.gmra.mxu0 %v1217
  %v1318 = vpop.f32.mrf.mxu0
  %v1319 = vadd.f32 %v1267, %v1318
  %v1320 = vpop.f32.mrf.mxu0
  %1321 = vmatmul.bf16.gmra.mxu0 %v1220
  %v1322 = vpop.f32.mrf.mxu0
  %v1323 = vadd.f32 %v1271, %v1322
  %v1324 = vpop.f32.mrf.mxu0
  %1325 = vmatmul.bf16.gmra.mxu0 %v1223
  %v1326 = vpop.f32.mrf.mxu0
  %v1327 = vadd.f32 %v1275, %v1326
  %v1328 = vpop.f32.mrf.mxu0
  %1329 = vmatmul.bf16.gmra.mxu0 %v1226
  %v1330 = vpop.f32.mrf.mxu0
  %v1331 = vadd.f32 %v1279, %v1330
  %v1332 = vpop.f32.mrf.mxu0
  %1333 = vmatmul.bf16.gmra.mxu0 %v1229
  %v1334 = vpop.f32.mrf.mxu0
  %v1335 = vadd.f32 %v1283, %v1334
  %v1336 = vpop.f32.mrf.mxu0
  %1337 = vmatmul.bf16.gmra.mxu0 %v1232
  %v1338 = vpop.f32.mrf.mxu0
  %v1339 = vadd.f32 %v1287, %v1338
  %v1340 = vpop.f32.mrf.mxu0
  %1341 = vmatmul.bf16.gmra.mxu0 %v1235
  %v1342 = vpop.f32.mrf.mxu0
  %v1343 = vpop.f32.mrf.mxu0
  %1344 = vdwg.mxu0
  %v1347 = vunpack.c.l.b16 %v956
  %v1348 = vunpack.c.h.b16 %v956
  %v1349 = vunpack.c.l.b16 %v957
  %v1350 = vunpack.c.h.b16 %v957
  %v1351 = vpack.c.b16 %v1349, %v1347
  %v1352 = vpack.c.b16 %v1350, %v1348
  %v1353 = vpack.c.b16 %v1089, %v1089
  %v1354 = vpack.c.b16 %v1090, %v1090
  %v1382 = vunpack.c.l.b16 %v981
  %v1383 = vunpack.c.l.b16 %v982
  %v1384 = vunpack.c.l.b16 %v983
  %v1385 = vunpack.c.l.b16 %v984
  %v1386 = vunpack.c.l.b16 %v985
  %v1387 = vunpack.c.l.b16 %v986
  %v1388 = vunpack.c.l.b16 %v987
  %v1389 = vunpack.c.l.b16 %v988
  %v1390 = vunpack.c.l.b16 %v989
  %v1391 = vunpack.c.l.b16 %v990
  %v1392 = vunpack.c.l.b16 %v991
  %v1393 = vunpack.c.l.b16 %v992
  %v1394 = vunpack.c.l.b16 %v993
  %v1395 = vunpack.c.l.b16 %v994
  %v1396 = vunpack.c.l.b16 %v995
  %v1397 = vunpack.c.l.b16 %v996
  %v1398 = vunpack.c.l.b16 %v997
  %v1399 = vunpack.c.l.b16 %v998
  %v1400 = vunpack.c.l.b16 %v999
  %v1401 = vunpack.c.l.b16 %v1000
  %v1402 = vunpack.c.l.b16 %v1001
  %v1403 = vunpack.c.l.b16 %v1002
  %v1404 = vunpack.c.l.b16 %v1003
  %v1405 = vunpack.c.l.b16 %v1004
  %v1406 = vunpack.c.l.b16 %v1005
  %v1407 = vpack.c.b16 %v1383, %v1382
  %v1408 = vpack.c.b16 %v1385, %v1384
  %v1409 = vpack.c.b16 %v1387, %v1386
  %v1410 = vpack.c.b16 %v1389, %v1388
  %v1411 = vpack.c.b16 %v1391, %v1390
  %v1412 = vpack.c.b16 %v1393, %v1392
  %v1413 = vpack.c.b16 %v1395, %v1394
  %v1414 = vpack.c.b16 %v1397, %v1396
  %v1415 = vpack.c.b16 %v1399, %v1398
  %v1416 = vpack.c.b16 %v1401, %v1400
  %v1417 = vpack.c.b16 %v1403, %v1402
  %v1418 = vpack.c.b16 %v1405, %v1404
  %v1419 = vpack.c.b16 %v1406, %v1406
  %v1433 = vsel %vm1203, %v1352, 0
  %v1436 = vsel %vm1203, %v1354, 0
  %v1439 = vsel %vm1237, %v1419, 0
  %1441 = vmatpush.bf16.msra.mxu0 %v1414
  %1442 = vmatpush.bf16.msra.mxu0 %v1413
  %1443 = vmatpush.bf16.msra.mxu0 %v1412
  %1444 = vmatpush.bf16.msra.mxu0 %v1411
  %1445 = vmatpush.bf16.msra.mxu0 %v1410
  %1446 = vmatpush.bf16.msra.mxu0 %v1409
  %1447 = vmatpush.bf16.msra.mxu0 %v1408
  %1448 = vmatpush.bf16.msra.mxu0 %v1407
  %1449 = vmatmul.bf16.gmra.mxu0 %v1351
  %v1450 = vpop.f32.mrf.mxu0
  %v1451 = vadd.f32 %v1303, %v1450
  %v1452 = vpop.f32.mrf.mxu0
  %1453 = vmatmul.bf16.gmra.mxu0 %v1095
  %v1454 = vpop.f32.mrf.mxu0
  %v1455 = vadd.f32 %v1307, %v1454
  %v1456 = vpop.f32.mrf.mxu0
  %1457 = vmatmul.bf16.gmra.mxu0 %v1097
  %v1458 = vpop.f32.mrf.mxu0
  %v1459 = vadd.f32 %v1311, %v1458
  %v1460 = vpop.f32.mrf.mxu0
  %1461 = vmatmul.bf16.gmra.mxu0 %v1099
  %v1462 = vpop.f32.mrf.mxu0
  %v1463 = vadd.f32 %v1315, %v1462
  %v1464 = vpop.f32.mrf.mxu0
  %1465 = vmatmul.bf16.gmra.mxu0 %v1101
  %v1466 = vpop.f32.mrf.mxu0
  %v1467 = vadd.f32 %v1319, %v1466
  %v1468 = vpop.f32.mrf.mxu0
  %1469 = vmatmul.bf16.gmra.mxu0 %v1103
  %v1470 = vpop.f32.mrf.mxu0
  %v1471 = vadd.f32 %v1323, %v1470
  %v1472 = vpop.f32.mrf.mxu0
  %1473 = vmatmul.bf16.gmra.mxu0 %v1105
  %v1474 = vpop.f32.mrf.mxu0
  %v1475 = vadd.f32 %v1327, %v1474
  %v1476 = vpop.f32.mrf.mxu0
  %1477 = vmatmul.bf16.gmra.mxu0 %v1107
  %v1478 = vpop.f32.mrf.mxu0
  %v1479 = vadd.f32 %v1331, %v1478
  %v1480 = vpop.f32.mrf.mxu0
  %1481 = vmatmul.bf16.gmra.mxu0 %v1109
  %v1482 = vpop.f32.mrf.mxu0
  %v1483 = vadd.f32 %v1335, %v1482
  %v1484 = vpop.f32.mrf.mxu0
  %1485 = vmatmul.bf16.gmra.mxu0 %v1111
  %v1486 = vpop.f32.mrf.mxu0
  %v1487 = vadd.f32 %v1339, %v1486
  %v1488 = vpop.f32.mrf.mxu0
  %1489 = vmatmul.bf16.gmra.mxu0 %v1353
  %v1490 = vpop.f32.mrf.mxu0
  %v1491 = vpop.f32.mrf.mxu0
  %1492 = vdwg.mxu0
  %1493 = vmatpush.bf16.msra.mxu0 0
  %1494 = vmatpush.bf16.msra.mxu0 0
  %1495 = vmatpush.bf16.msra.mxu0 0
  %1496 = vmatpush.bf16.msra.mxu0 %v1439
  %1497 = vmatpush.bf16.msra.mxu0 %v1418
  %1498 = vmatpush.bf16.msra.mxu0 %v1417
  %1499 = vmatpush.bf16.msra.mxu0 %v1416
  %1500 = vmatpush.bf16.msra.mxu0 %v1415
  %1501 = vmatmul.bf16.gmra.mxu0 %v1433
  %v1502 = vpop.f32.mrf.mxu0
  %v1503 = vadd.f32 %v1451, %v1502
  %v1504 = vpop.f32.mrf.mxu0
  %1505 = vmatmul.bf16.gmra.mxu0 %v1205
  %v1506 = vpop.f32.mrf.mxu0
  %v1507 = vadd.f32 %v1455, %v1506
  %v1508 = vpop.f32.mrf.mxu0
  %1509 = vmatmul.bf16.gmra.mxu0 %v1208
  %v1510 = vpop.f32.mrf.mxu0
  %v1511 = vadd.f32 %v1459, %v1510
  %v1512 = vpop.f32.mrf.mxu0
  %1513 = vmatmul.bf16.gmra.mxu0 %v1211
  %v1514 = vpop.f32.mrf.mxu0
  %v1515 = vadd.f32 %v1463, %v1514
  %v1516 = vpop.f32.mrf.mxu0
  %1517 = vmatmul.bf16.gmra.mxu0 %v1214
  %v1518 = vpop.f32.mrf.mxu0
  %v1519 = vadd.f32 %v1467, %v1518
  %v1520 = vpop.f32.mrf.mxu0
  %1521 = vmatmul.bf16.gmra.mxu0 %v1217
  %v1522 = vpop.f32.mrf.mxu0
  %v1523 = vadd.f32 %v1471, %v1522
  %v1524 = vpop.f32.mrf.mxu0
  %1525 = vmatmul.bf16.gmra.mxu0 %v1220
  %v1526 = vpop.f32.mrf.mxu0
  %v1527 = vadd.f32 %v1475, %v1526
  %v1528 = vpop.f32.mrf.mxu0
  %1529 = vmatmul.bf16.gmra.mxu0 %v1223
  %v1530 = vpop.f32.mrf.mxu0
  %v1531 = vadd.f32 %v1479, %v1530
  %v1532 = vpop.f32.mrf.mxu0
  %1533 = vmatmul.bf16.gmra.mxu0 %v1226
  %v1534 = vpop.f32.mrf.mxu0
  %v1535 = vadd.f32 %v1483, %v1534
  %v1536 = vpop.f32.mrf.mxu0
  %1537 = vmatmul.bf16.gmra.mxu0 %v1229
  %v1538 = vpop.f32.mrf.mxu0
  %v1539 = vadd.f32 %v1487, %v1538
  %v1540 = vpop.f32.mrf.mxu0
  %1541 = vmatmul.bf16.gmra.mxu0 %v1436
  %v1542 = vpop.f32.mrf.mxu0
  %v1543 = vpop.f32.mrf.mxu0
  %1544 = vdwg.mxu0
  %s1545 = scalar_lea.vmem %s3, 200
  %v1546 = vld [vmem:[%s1545] sm:$0xf]
  %v1547 = vld [vmem:[%s1545 + $0x4] sm:$0xf]
  %v1548 = vld [vmem:[%s1545 + $0x8] sm:$0xf]
  %v1549 = vld [vmem:[%s1545 + $0xc] sm:$0xf]
  %v1550 = vld [vmem:[%s1545 + $0x10] sm:$0xf]
  %v1551 = vld [vmem:[%s1545 + $0x14] sm:$0xf]
  %v1552 = vld [vmem:[%s1545 + $0x18] sm:$0xf]
  %v1553 = vld [vmem:[%s1545 + $0x1c] sm:$0xf]
  %v1554 = vld [vmem:[%s1545 + $0x20] sm:$0xf]
  %v1555 = vld [vmem:[%s1545 + $0x24] sm:$0xf]
  %v1556 = vld [vmem:[%s1545 + $0x28] sm:$0xf]
  %v1557 = vld [vmem:[%s1545 + $0x2c] sm:$0xf]
  %v1558 = vld [vmem:[%s1545 + $0x30] sm:$0xf]
  %v1559 = vld [vmem:[%s1545 + $0x34] sm:$0xf]
  %v1560 = vld [vmem:[%s1545 + $0x38] sm:$0xf]
  %v1561 = vld [vmem:[%s1545 + $0x3c] sm:$0xf]
  %v1562 = vld [vmem:[%s1545 + $0x40] sm:$0xf]
  %v1563 = vld [vmem:[%s1545 + $0x44] sm:$0xf]
  %v1564 = vld [vmem:[%s1545 + $0x48] sm:$0xf]
  %v1565 = vld [vmem:[%s1545 + $0x4c] sm:$0xf]
  %v1566 = vld [vmem:[%s1545 + $0x50] sm:$0xf]
  %v1567 = vld [vmem:[%s1545 + $0x54] sm:$0xf]
  %v1568 = vld [vmem:[%s1545 + $0x58] sm:$0xf]
  %v1569 = vld [vmem:[%s1545 + $0x5c] sm:$0xf]
  %v1570 = vld [vmem:[%s1545 + $0x60] sm:$0xf]
  %v1573 = vunpack.c.l.b16 %v979
  %v1574 = vunpack.c.h.b16 %v979
  %v1575 = vunpack.c.l.b16 %v980
  %v1576 = vunpack.c.h.b16 %v980
  %v1577 = vpack.c.b16 %v1573, %v1093
  %v1578 = vpack.c.b16 %v1574, %v1094
  %v1579 = vpack.c.b16 %v1575, %v1575
  %v1580 = vpack.c.b16 %v1576, %v1576
  %v1608 = vunpack.c.l.b16 %v1546
  %v1609 = vunpack.c.l.b16 %v1547
  %v1610 = vunpack.c.l.b16 %v1548
  %v1611 = vunpack.c.l.b16 %v1549
  %v1612 = vunpack.c.l.b16 %v1550
  %v1613 = vunpack.c.l.b16 %v1551
  %v1614 = vunpack.c.l.b16 %v1552
  %v1615 = vunpack.c.l.b16 %v1553
  %v1616 = vunpack.c.l.b16 %v1554
  %v1617 = vunpack.c.l.b16 %v1555
  %v1618 = vunpack.c.l.b16 %v1556
  %v1619 = vunpack.c.l.b16 %v1557
  %v1620 = vunpack.c.l.b16 %v1558
  %v1621 = vunpack.c.l.b16 %v1559
  %v1622 = vunpack.c.l.b16 %v1560
  %v1623 = vunpack.c.l.b16 %v1561
  %v1624 = vunpack.c.l.b16 %v1562
  %v1625 = vunpack.c.l.b16 %v1563
  %v1626 = vunpack.c.l.b16 %v1564
  %v1627 = vunpack.c.l.b16 %v1565
  %v1628 = vunpack.c.l.b16 %v1566
  %v1629 = vunpack.c.l.b16 %v1567
  %v1630 = vunpack.c.l.b16 %v1568
  %v1631 = vunpack.c.l.b16 %v1569
  %v1632 = vunpack.c.l.b16 %v1570
  %v1633 = vpack.c.b16 %v1609, %v1608
  %v1634 = vpack.c.b16 %v1611, %v1610
  %v1635 = vpack.c.b16 %v1613, %v1612
  %v1636 = vpack.c.b16 %v1615, %v1614
  %v1637 = vpack.c.b16 %v1617, %v1616
  %v1638 = vpack.c.b16 %v1619, %v1618
  %v1639 = vpack.c.b16 %v1621, %v1620
  %v1640 = vpack.c.b16 %v1623, %v1622
  %v1641 = vpack.c.b16 %v1625, %v1624
  %v1642 = vpack.c.b16 %v1627, %v1626
  %v1643 = vpack.c.b16 %v1629, %v1628
  %v1644 = vpack.c.b16 %v1631, %v1630
  %v1645 = vpack.c.b16 %v1632, %v1632
  %v1659 = vsel %vm1203, %v1578, 0
  %v1662 = vsel %vm1203, %v1580, 0
  %v1665 = vsel %vm1237, %v1645, 0
  %1667 = vmatpush.bf16.msra.mxu0 %v1640
  %1668 = vmatpush.bf16.msra.mxu0 %v1639
  %1669 = vmatpush.bf16.msra.mxu0 %v1638
  %1670 = vmatpush.bf16.msra.mxu0 %v1637
  %1671 = vmatpush.bf16.msra.mxu0 %v1636
  %1672 = vmatpush.bf16.msra.mxu0 %v1635
  %1673 = vmatpush.bf16.msra.mxu0 %v1634
  %1674 = vmatpush.bf16.msra.mxu0 %v1633
  %1675 = vmatmul.bf16.gmra.mxu0 %v1097
  %v1676 = vpop.f32.mrf.mxu0
  %v1677 = vadd.f32 0.0, %v1676
  %v1678 = vpop.f32.mrf.mxu0
  %1679 = vmatmul.bf16.gmra.mxu0 %v1099
  %v1680 = vpop.f32.mrf.mxu0
  %v1681 = vadd.f32 0.0, %v1680
  %v1682 = vpop.f32.mrf.mxu0
  %1683 = vmatmul.bf16.gmra.mxu0 %v1101
  %v1684 = vpop.f32.mrf.mxu0
  %v1685 = vadd.f32 0.0, %v1684
  %v1686 = vpop.f32.mrf.mxu0
  %1687 = vmatmul.bf16.gmra.mxu0 %v1103
  %v1688 = vpop.f32.mrf.mxu0
  %v1689 = vadd.f32 0.0, %v1688
  %v1690 = vpop.f32.mrf.mxu0
  %1691 = vmatmul.bf16.gmra.mxu0 %v1105
  %v1692 = vpop.f32.mrf.mxu0
  %v1693 = vadd.f32 0.0, %v1692
  %v1694 = vpop.f32.mrf.mxu0
  %1695 = vmatmul.bf16.gmra.mxu0 %v1107
  %v1696 = vpop.f32.mrf.mxu0
  %v1697 = vadd.f32 0.0, %v1696
  %v1698 = vpop.f32.mrf.mxu0
  %1699 = vmatmul.bf16.gmra.mxu0 %v1109
  %v1700 = vpop.f32.mrf.mxu0
  %v1701 = vadd.f32 0.0, %v1700
  %v1702 = vpop.f32.mrf.mxu0
  %1703 = vmatmul.bf16.gmra.mxu0 %v1111
  %v1704 = vpop.f32.mrf.mxu0
  %v1705 = vadd.f32 0.0, %v1704
  %v1706 = vpop.f32.mrf.mxu0
  %1707 = vmatmul.bf16.gmra.mxu0 %v1113
  %v1708 = vpop.f32.mrf.mxu0
  %v1709 = vadd.f32 0.0, %v1708
  %v1710 = vpop.f32.mrf.mxu0
  %1711 = vmatmul.bf16.gmra.mxu0 %v1577
  %v1712 = vpop.f32.mrf.mxu0
  %v1713 = vadd.f32 0.0, %v1712
  %v1714 = vpop.f32.mrf.mxu0
  %1715 = vmatmul.bf16.gmra.mxu0 %v1579
  %v1716 = vpop.f32.mrf.mxu0
  %v1717 = vpop.f32.mrf.mxu0
  %1718 = vdwg.mxu0
  %1719 = vmatpush.bf16.msra.mxu0 0
  %1720 = vmatpush.bf16.msra.mxu0 0
  %1721 = vmatpush.bf16.msra.mxu0 0
  %1722 = vmatpush.bf16.msra.mxu0 %v1665
  %1723 = vmatpush.bf16.msra.mxu0 %v1644
  %1724 = vmatpush.bf16.msra.mxu0 %v1643
  %1725 = vmatpush.bf16.msra.mxu0 %v1642
  %1726 = vmatpush.bf16.msra.mxu0 %v1641
  %1727 = vmatmul.bf16.gmra.mxu0 %v1208
  %v1728 = vpop.f32.mrf.mxu0
  %v1729 = vadd.f32 %v1677, %v1728
  %v1730 = vpop.f32.mrf.mxu0
  %1731 = vmatmul.bf16.gmra.mxu0 %v1211
  %v1732 = vpop.f32.mrf.mxu0
  %v1733 = vadd.f32 %v1681, %v1732
  %v1734 = vpop.f32.mrf.mxu0
  %1735 = vmatmul.bf16.gmra.mxu0 %v1214
  %v1736 = vpop.f32.mrf.mxu0
  %v1737 = vadd.f32 %v1685, %v1736
  %v1738 = vpop.f32.mrf.mxu0
  %1739 = vmatmul.bf16.gmra.mxu0 %v1217
  %v1740 = vpop.f32.mrf.mxu0
  %v1741 = vadd.f32 %v1689, %v1740
  %v1742 = vpop.f32.mrf.mxu0
  %1743 = vmatmul.bf16.gmra.mxu0 %v1220
  %v1744 = vpop.f32.mrf.mxu0
  %v1745 = vadd.f32 %v1693, %v1744
  %v1746 = vpop.f32.mrf.mxu0
  %1747 = vmatmul.bf16.gmra.mxu0 %v1223
  %v1748 = vpop.f32.mrf.mxu0
  %v1749 = vadd.f32 %v1697, %v1748
  %v1750 = vpop.f32.mrf.mxu0
  %1751 = vmatmul.bf16.gmra.mxu0 %v1226
  %v1752 = vpop.f32.mrf.mxu0
  %v1753 = vadd.f32 %v1701, %v1752
  %v1754 = vpop.f32.mrf.mxu0
  %1755 = vmatmul.bf16.gmra.mxu0 %v1229
  %v1756 = vpop.f32.mrf.mxu0
  %v1757 = vadd.f32 %v1705, %v1756
  %v1758 = vpop.f32.mrf.mxu0
  %1759 = vmatmul.bf16.gmra.mxu0 %v1232
  %v1760 = vpop.f32.mrf.mxu0
  %v1761 = vadd.f32 %v1709, %v1760
  %v1762 = vpop.f32.mrf.mxu0
  %1763 = vmatmul.bf16.gmra.mxu0 %v1659
  %v1764 = vpop.f32.mrf.mxu0
  %v1765 = vadd.f32 %v1713, %v1764
  %v1766 = vpop.f32.mrf.mxu0
  %1767 = vmatmul.bf16.gmra.mxu0 %v1662
  %v1768 = vpop.f32.mrf.mxu0
  %v1769 = vpop.f32.mrf.mxu0
  %1770 = vdwg.mxu0
  %v1771 = vadd.f32 %v1503, %v1729
  %v1772 = vadd.f32 %v1507, %v1733
  %v1773 = vadd.f32 %v1511, %v1737
  %v1774 = vadd.f32 %v1515, %v1741
  %v1775 = vadd.f32 %v1519, %v1745
  %v1776 = vadd.f32 %v1523, %v1749
  %v1777 = vadd.f32 %v1527, %v1753
  %v1778 = vadd.f32 %v1531, %v1757
  %v1779 = vadd.f32 %v1535, %v1761
  %v1780 = vadd.f32 %v1539, %v1765
  %v1781 = vld [vmem:[%s4] sm:$0x1]
  %v1783 = vperm.slane %v1781, 0
  %v1785 = vadd.f32 %v1771, %v1783
  %v1786 = vadd.f32 %v1772, %v1783
  %v1787 = vadd.f32 %v1773, %v1783
  %v1788 = vadd.f32 %v1774, %v1783
  %v1789 = vadd.f32 %v1775, %v1783
  %v1790 = vadd.f32 %v1776, %v1783
  %v1791 = vadd.f32 %v1777, %v1783
  %v1792 = vadd.f32 %v1778, %v1783
  %v1793 = vadd.f32 %v1779, %v1783
  %v1794 = vadd.f32 %v1780, %v1783
  %v1795 = vmax.f32 %v1785, 0.0
  %v1796 = vmax.f32 %v1786, 0.0
  %v1797 = vmax.f32 %v1787, 0.0
  %v1798 = vmax.f32 %v1788, 0.0
  %v1799 = vmax.f32 %v1789, 0.0
  %v1800 = vmax.f32 %v1790, 0.0
  %v1801 = vmax.f32 %v1791, 0.0
  %v1802 = vmax.f32 %v1792, 0.0
  %v1803 = vmax.f32 %v1793, 0.0
  %v1804 = vmax.f32 %v1794, 0.0
  %v1805 = vmax.f32 %v1795, %v1796
  %v1806 = vmax.f32 %v1797, %v1798
  %v1807 = vmax.f32 %v1799, %v1800
  %v1808 = vmax.f32 %v1801, %v1802
  %v1809 = vmax.f32 %v1803, %v1804
  %1815 = vrot.lane.b32.xlu0 %v1805, 120
  %v1816 = vpop.permute.xlu0 %1815
  %1817 = vrot.lane.b32.xlu0 %v1806, 120
  %v1818 = vpop.permute.xlu0 %1817
  %1819 = vrot.lane.b32.xlu0 %v1807, 120
  %v1820 = vpop.permute.xlu0 %1819
  %1821 = vrot.lane.b32.xlu0 %v1808, 120
  %v1822 = vpop.permute.xlu0 %1821
  %1823 = vrot.lane.b32.xlu0 %v1809, 120
  %v1824 = vpop.permute.xlu0 %1823
  %v1830 = vmax.f32 %v1805, %v1816
  %v1831 = vmax.f32 %v1806, %v1818
  %v1832 = vmax.f32 %v1807, %v1820
  %v1833 = vmax.f32 %v1808, %v1822
  %v1834 = vmax.f32 %v1809, %v1824
  %1836 = vrot.lane.b32.xlu0 %v1831, 80
  %v1837 = vpop.permute.xlu0 %1836
  %1840 = vrot.lane.b32.xlu0 %v1832, 32
  %v1841 = vpop.permute.xlu0 %1840
  %1844 = vrot.lane.b32.xlu0 %v1833, 112
  %v1845 = vpop.permute.xlu0 %1844
  %1848 = vrot.lane.b32.xlu0 %v1834, 64
  %v1849 = vpop.permute.xlu0 %1848
  %vm1851 = vcmask 654336
  %v1852 = vsel %vm1851, %v1830, %v1837
  %vm1853 = vcmask 261120
  %v1854 = vsel %vm1853, %v1837, %v1841
  %vm1855 = vcmask 916480
  %v1856 = vsel %vm1855, %v1854, %v1845
  %vm1857 = vcmask 523264
  %v1858 = vsel %vm1857, %v1845, %v1849
  %v1859 = vpack.c.bf16 %v1852, %v1852
  %v1860 = vpack.c.bf16 %v1856, %v1856
  %v1861 = vpack.c.bf16 %v1858, %v1858
  %v1862 = vpack.c.bf16 %v1849, %v1849
  %v1863 = vld [vmem:[%s5] sm:$0xf]
  %v1864 = vld [vmem:[%s5 + $0x4] sm:$0xf]
  %v1865 = vld [vmem:[%s5 + $0x8] sm:$0xf]
  %v1866 = vld [vmem:[%s5 + $0xc] sm:$0xf]
  %v1867 = vld [vmem:[%s5 + $0x10] sm:$0xf]
  %v1868 = vld [vmem:[%s5 + $0x14] sm:$0xf]
  %v1869 = vld [vmem:[%s5 + $0x18] sm:$0xf]
  %v1870 = vld [vmem:[%s5 + $0x1c] sm:$0xf]
  %v1871 = vld [vmem:[%s5 + $0x20] sm:$0xf]
  %v1872 = vld [vmem:[%s5 + $0x24] sm:$0xf]
  %v1873 = vld [vmem:[%s5 + $0x28] sm:$0xf]
  %v1874 = vld [vmem:[%s5 + $0x2c] sm:$0xf]
  %v1875 = vld [vmem:[%s5 + $0x30] sm:$0xf]
  %v1876 = vld [vmem:[%s5 + $0x34] sm:$0xf]
  %v1877 = vld [vmem:[%s5 + $0x38] sm:$0xf]
  %v1878 = vld [vmem:[%s5 + $0x3c] sm:$0xf]
  %v1879 = vld [vmem:[%s5 + $0x40] sm:$0xf]
  %v1880 = vld [vmem:[%s5 + $0x44] sm:$0xf]
  %v1881 = vld [vmem:[%s5 + $0x48] sm:$0xf]
  %v1882 = vld [vmem:[%s5 + $0x4c] sm:$0xf]
  %v1883 = vld [vmem:[%s5 + $0x50] sm:$0xf]
  %v1884 = vld [vmem:[%s5 + $0x54] sm:$0xf]
  %v1885 = vld [vmem:[%s5 + $0x58] sm:$0xf]
  %v1886 = vld [vmem:[%s5 + $0x5c] sm:$0xf]
  %v1887 = vld [vmem:[%s5 + $0x60] sm:$0xf]
  %v1888 = vld [vmem:[%s5 + $0x64] sm:$0xf]
  %v1889 = vld [vmem:[%s5 + $0x68] sm:$0xf]
  %v1890 = vld [vmem:[%s5 + $0x6c] sm:$0xf]
  %v1891 = vld [vmem:[%s5 + $0x70] sm:$0xf]
  %v1892 = vld [vmem:[%s5 + $0x74] sm:$0xf]
  %v1893 = vld [vmem:[%s5 + $0x78] sm:$0xf]
  %v1894 = vld [vmem:[%s5 + $0x7c] sm:$0xf]
  %v1895 = vld [vmem:[%s5 + $0x80] sm:$0xf]
  %v1896 = vld [vmem:[%s5 + $0x84] sm:$0xf]
  %v1897 = vld [vmem:[%s5 + $0x88] sm:$0xf]
  %v1898 = vld [vmem:[%s5 + $0x8c] sm:$0xf]
  %v1899 = vld [vmem:[%s5 + $0x90] sm:$0xf]
  %v1900 = vld [vmem:[%s5 + $0x94] sm:$0xf]
  %v1901 = vld [vmem:[%s5 + $0x98] sm:$0xf]
  %v1902 = vld [vmem:[%s5 + $0x9c] sm:$0xf]
  %v1903 = vld [vmem:[%s5 + $0xa0] sm:$0xf]
  %v1904 = vld [vmem:[%s5 + $0xa4] sm:$0xf]
  %v1905 = vld [vmem:[%s5 + $0xa8] sm:$0xf]
  %v1906 = vld [vmem:[%s5 + $0xac] sm:$0xf]
  %v1907 = vld [vmem:[%s5 + $0xb0] sm:$0xf]
  %v1908 = vld [vmem:[%s5 + $0xb4] sm:$0xf]
  %v1909 = vld [vmem:[%s5 + $0xb8] sm:$0xf]
  %v1910 = vld [vmem:[%s5 + $0xbc] sm:$0xf]
  %v1911 = vld [vmem:[%s5 + $0xc0] sm:$0xf]
  %v1912 = vld [vmem:[%s5 + $0xc4] sm:$0xf]
  %v1913 = vld [vmem:[%s6] sm:$0x1]
  %v1915 = vperm.slane %v1913, 0
  %v1967 = vunpack.c.l.b16 %v1863
  %v1968 = vunpack.c.l.b16 %v1864
  %v1969 = vunpack.c.l.b16 %v1865
  %v1970 = vunpack.c.l.b16 %v1866
  %v1971 = vunpack.c.l.b16 %v1867
  %v1972 = vunpack.c.l.b16 %v1868
  %v1973 = vunpack.c.l.b16 %v1869
  %v1974 = vunpack.c.l.b16 %v1870
  %v1975 = vunpack.c.l.b16 %v1871
  %v1976 = vunpack.c.l.b16 %v1872
  %v1977 = vunpack.c.l.b16 %v1873
  %v1978 = vunpack.c.l.b16 %v1874
  %v1979 = vunpack.c.l.b16 %v1875
  %v1980 = vunpack.c.l.b16 %v1876
  %v1981 = vunpack.c.l.b16 %v1877
  %v1982 = vunpack.c.l.b16 %v1878
  %v1983 = vunpack.c.l.b16 %v1879
  %v1984 = vunpack.c.l.b16 %v1880
  %v1985 = vunpack.c.l.b16 %v1881
  %v1986 = vunpack.c.l.b16 %v1882
  %v1987 = vunpack.c.l.b16 %v1883
  %v1988 = vunpack.c.l.b16 %v1884
  %v1989 = vunpack.c.l.b16 %v1885
  %v1990 = vunpack.c.l.b16 %v1886
  %v1991 = vunpack.c.l.b16 %v1887
  %v1992 = vunpack.c.l.b16 %v1888
  %v1993 = vunpack.c.l.b16 %v1889
  %v1994 = vunpack.c.l.b16 %v1890
  %v1995 = vunpack.c.l.b16 %v1891
  %v1996 = vunpack.c.l.b16 %v1892
  %v1997 = vunpack.c.l.b16 %v1893
  %v1998 = vunpack.c.l.b16 %v1894
  %v1999 = vunpack.c.l.b16 %v1895
  %v2000 = vunpack.c.l.b16 %v1896
  %v2001 = vunpack.c.l.b16 %v1897
  %v2002 = vunpack.c.l.b16 %v1898
  %v2003 = vunpack.c.l.b16 %v1899
  %v2004 = vunpack.c.l.b16 %v1900
  %v2005 = vunpack.c.l.b16 %v1901
  %v2006 = vunpack.c.l.b16 %v1902
  %v2007 = vunpack.c.l.b16 %v1903
  %v2008 = vunpack.c.l.b16 %v1904
  %v2009 = vunpack.c.l.b16 %v1905
  %v2010 = vunpack.c.l.b16 %v1906
  %v2011 = vunpack.c.l.b16 %v1907
  %v2012 = vunpack.c.l.b16 %v1908
  %v2013 = vunpack.c.l.b16 %v1909
  %v2014 = vunpack.c.l.b16 %v1910
  %v2015 = vunpack.c.l.b16 %v1911
  %v2016 = vunpack.c.l.b16 %v1912
  %v2017 = vpack.c.b16 %v1968, %v1967
  %v2018 = vpack.c.b16 %v1970, %v1969
  %v2019 = vpack.c.b16 %v1972, %v1971
  %v2020 = vpack.c.b16 %v1974, %v1973
  %v2021 = vpack.c.b16 %v1976, %v1975
  %v2022 = vpack.c.b16 %v1978, %v1977
  %v2023 = vpack.c.b16 %v1980, %v1979
  %v2024 = vpack.c.b16 %v1982, %v1981
  %v2025 = vpack.c.b16 %v1984, %v1983
  %v2026 = vpack.c.b16 %v1986, %v1985
  %v2027 = vpack.c.b16 %v1988, %v1987
  %v2028 = vpack.c.b16 %v1990, %v1989
  %v2029 = vpack.c.b16 %v1992, %v1991
  %v2030 = vpack.c.b16 %v1994, %v1993
  %v2031 = vpack.c.b16 %v1996, %v1995
  %v2032 = vpack.c.b16 %v1998, %v1997
  %v2033 = vpack.c.b16 %v2000, %v1999
  %v2034 = vpack.c.b16 %v2002, %v2001
  %v2035 = vpack.c.b16 %v2004, %v2003
  %v2036 = vpack.c.b16 %v2006, %v2005
  %v2037 = vpack.c.b16 %v2008, %v2007
  %v2038 = vpack.c.b16 %v2010, %v2009
  %v2039 = vpack.c.b16 %v2012, %v2011
  %v2040 = vpack.c.b16 %v2014, %v2013
  %v2041 = vpack.c.b16 %v2016, %v2015
  %vm2067 = vcmask 130048
  %v2069 = vsel %vm2067, %v1862, 0
  %2071 = vmatpush.bf16.msra.mxu0 %v2024
  %2072 = vmatpush.bf16.msra.mxu0 %v2023
  %2073 = vmatpush.bf16.msra.mxu0 %v2022
  %2074 = vmatpush.bf16.msra.mxu0 %v2021
  %2075 = vmatpush.bf16.msra.mxu0 %v2020
  %2076 = vmatpush.bf16.msra.mxu0 %v2019
  %2077 = vmatpush.bf16.msra.mxu0 %v2018
  %2078 = vmatpush.bf16.msra.mxu0 %v2017
  %2079 = vmatmul.bf16.gmra.mxu0 %v1859
  %v2080 = vpop.f32.mrf.mxu0
  %v2081 = vadd.f32 %v1915, %v2080
  %v2082 = vpop.f32.mrf.mxu0
  %2083 = vdwg.mxu0
  %2084 = vmatpush.bf16.msra.mxu0 %v2032
  %2085 = vmatpush.bf16.msra.mxu0 %v2031
  %2086 = vmatpush.bf16.msra.mxu0 %v2030
  %2087 = vmatpush.bf16.msra.mxu0 %v2029
  %2088 = vmatpush.bf16.msra.mxu0 %v2028
  %2089 = vmatpush.bf16.msra.mxu0 %v2027
  %2090 = vmatpush.bf16.msra.mxu0 %v2026
  %2091 = vmatpush.bf16.msra.mxu0 %v2025
  %2092 = vmatmul.bf16.gmra.mxu0 %v1860
  %v2093 = vpop.f32.mrf.mxu0
  %v2094 = vadd.f32 %v2081, %v2093
  %v2095 = vpop.f32.mrf.mxu0
  %2096 = vdwg.mxu0
  %2097 = vmatpush.bf16.msra.mxu0 %v2040
  %2098 = vmatpush.bf16.msra.mxu0 %v2039
  %2099 = vmatpush.bf16.msra.mxu0 %v2038
  %2100 = vmatpush.bf16.msra.mxu0 %v2037
  %2101 = vmatpush.bf16.msra.mxu0 %v2036
  %2102 = vmatpush.bf16.msra.mxu0 %v2035
  %2103 = vmatpush.bf16.msra.mxu0 %v2034
  %2104 = vmatpush.bf16.msra.mxu0 %v2033
  %2105 = vmatmul.bf16.gmra.mxu0 %v1861
  %v2106 = vpop.f32.mrf.mxu0
  %v2107 = vadd.f32 %v2094, %v2106
  %v2108 = vpop.f32.mrf.mxu0
  %2109 = vdwg.mxu0
  %2110 = vmatpush.bf16.msra.mxu0 0
  %2111 = vmatpush.bf16.msra.mxu0 0
  %2112 = vmatpush.bf16.msra.mxu0 0
  %2113 = vmatpush.bf16.msra.mxu0 0
  %2114 = vmatpush.bf16.msra.mxu0 0
  %2115 = vmatpush.bf16.msra.mxu0 0
  %2116 = vmatpush.bf16.msra.mxu0 0
  %2117 = vmatpush.bf16.msra.mxu0 %v2041
  %2118 = vmatmul.bf16.gmra.mxu0 %v2069
  %v2119 = vpop.f32.mrf.mxu0
  %v2120 = vadd.f32 %v2107, %v2119
  %v2121 = vpop.f32.mrf.mxu0
  %2122 = vdwg.mxu0
  %v2123 = vmax.f32 %v2120, 0.0
  %v2124 = vpack.c.bf16 %v2123, %v2123
  %v2125 = vld [vmem:[%s7] sm:$0xf]
  %v2126 = vld [vmem:[%s7 + $0x4] sm:$0xf]
  %v2127 = vld [vmem:[%s7 + $0x8] sm:$0xf]
  %v2128 = vld [vmem:[%s7 + $0xc] sm:$0xf]
  %v2129 = vld [vmem:[%s7 + $0x10] sm:$0xf]
  %v2130 = vld [vmem:[%s7 + $0x14] sm:$0xf]
  %v2131 = vld [vmem:[%s7 + $0x18] sm:$0xf]
  %v2132 = vld [vmem:[%s7 + $0x1c] sm:$0xf]
  %v2133 = vld [vmem:[%s8] sm:$0x1]
  %v2135 = vperm.slane %v2133, 0
  %v2145 = vunpack.c.l.b16 %v2125
  %v2146 = vunpack.c.l.b16 %v2126
  %v2147 = vunpack.c.l.b16 %v2127
  %v2148 = vunpack.c.l.b16 %v2128
  %v2149 = vunpack.c.l.b16 %v2129
  %v2150 = vunpack.c.l.b16 %v2130
  %v2151 = vunpack.c.l.b16 %v2131
  %v2152 = vunpack.c.l.b16 %v2132
  %v2153 = vpack.c.b16 %v2146, %v2145
  %v2154 = vpack.c.b16 %v2148, %v2147
  %v2155 = vpack.c.b16 %v2150, %v2149
  %v2156 = vpack.c.b16 %v2152, %v2151
  %v2162 = vsel %vm1857, %v2124, 0
  %2164 = vmatpush.bf16.msra.mxu0 0
  %2165 = vmatpush.bf16.msra.mxu0 0
  %2166 = vmatpush.bf16.msra.mxu0 0
  %2167 = vmatpush.bf16.msra.mxu0 0
  %2168 = vmatpush.bf16.msra.mxu0 %v2156
  %2169 = vmatpush.bf16.msra.mxu0 %v2155
  %2170 = vmatpush.bf16.msra.mxu0 %v2154
  %2171 = vmatpush.bf16.msra.mxu0 %v2153
  %2172 = vmatmul.bf16.gmra.mxu0 %v2162
  %v2173 = vpop.f32.mrf.mxu0
  %v2174 = vadd.f32 %v2135, %v2173
  %v2175 = vpop.f32.mrf.mxu0
  %2176 = vdwg.mxu0
  %2177 = vmax.xlane.f32.xlu0 %v2174
  %v2178 = vpop.xlane.xlu0 %2177
  %v2179 = vsub.f32 %v2174, %v2178
  %v2180 = vmul.f32 %v2179, 1.442695
  %v2181 = vpow.pop %v2180
  %2182 = vadd.xlane.f32.xlu0 %v2181
  %v2183 = vpop.xlane.xlu0 %2182
  %v2184 = vlog2.pop %v2183
  %v2185 = vmul.f32 %v2184, 0.6931472
  %v2186 = vsub.f32 %v2179, %v2185
  %2187 = vst [vmem:[%s9] sm:$0xff] %v2186
  // Predicated region
  $region38: #{convnet_forward.1} parent=0 // pred_check
    _
  $region39: #{convnet_forward.1} parent=0 // pred_check_branch
    %2189 = sbr.rel (0) target = $region41
  $region40: #{convnet_forward.1} parent=0 // pred_region
    _
  $region41: #{convnet_forward.1} parent=0 // pred_fallthru
    _
  // Predicated region
  $region42: #{convnet_forward.1} parent=0 // pred_check
    _
  $region43: #{convnet_forward.1} parent=0 // pred_check_branch
    %2191 = sbr.rel (0) target = $region45
  $region44: #{convnet_forward.1} parent=0 // pred_region
    _
  $region45: #{convnet_forward.1} parent=0 // pred_fallthru
    _

</llo_original>
